<compile_context>
chip_gen: v7x
topology: tpu7x:2x2x1
jax: 0.10.0
libtpu: 0.0.40
codegen_flags: <defaults>
</compile_context>

<pallas_src>
import jax
import jax.numpy as jnp
import numpy as np
from jax import lax
from jax.experimental import pallas as pl
from jax.experimental.pallas import tpu as pltpu


# Tile sizes: dst tile (MXU-output sublane axis) x src tile (lane axis).
#   _TM = 256 matches the 256-wide MXU on v6e/v7x (v5e simply takes 2 passes).
#   _TN = 512 keeps output stores lane-dense and amortizes ~0.35us/grid-step.
# Per-step VMEM (double-buffered): out 256*512*4*2 + adj 256*512*1*2 + feats tiles
# ~= 1.3 MiB, independent of graph size N.
_TM = 256
_TN = 512
_FEAT_PAD = 16   # bf16 sublane quantum; avoids padding D all the way to 128


def _round_up(x, m):
    return (x + m - 1) // m * m


def _distance_kernel(fd_ref, fs_ref, adj_ref, num_ref, den_ref):
    # fd_ref : (_TM, Dp)  bf16  dst-node features for this dst tile
    # fs_ref : (_TN, Dp)  bf16  src-node features for this src tile
    # adj_ref: (_TM, _TN) int8  adjacency mask, adj[v, u] = 1 iff edge u->v
    # num_ref: (_TM, _TN) f32   un-normalized masked softmax numerators
    # den_ref: (_TM, 1)   f32   per-dst denominator (resident across the src axis)
    j = pl.program_id(1)

    @pl.when(j == 0)
    def _init():
        den_ref[...] = jnp.zeros_like(den_ref)

    # dot[v, u] = feats[v] . feats[u] : bf16 operands, f32 accumulation on the MXU.
    dot = lax.dot_general(
        fd_ref[...], fs_ref[...],
        dimension_numbers=(((1,), (1,)), ((), ())),
        preferred_element_type=jnp.float32,
    )                                                       # (_TM, _TN) f32

    # score = exp(-|u.v| / 100) is in (0, 1] => exp(score) is in (1, e], so the
    # softmax needs no max-shift and cannot overflow.  Keep this invariant in
    # mind if the score expression is ever edited.
    score = jnp.exp(jnp.abs(dot) * jnp.float32(-1.0 / 100.0))
    # Mask at the use site (no full-tile f32 adjacency temporary).
    expv = jnp.where(adj_ref[...] != 0, jnp.exp(score), jnp.float32(0.0))

    num_ref[...] = expv
    den_ref[...] += jnp.sum(expv, axis=-1, keepdims=True)
    # TODO(synk): skip all-zero adjacency tiles for sparse graphs via
    #             PrefetchScalarGridSpec-driven index maps + pl.when.
    # TODO(synk): if the single EUP binds on v7x, replace the outer jnp.exp with
    #             a degree-4 Horner polynomial on the VPU (score is in (0, 1]).


@jax.jit
def _distance_dense(feats, adj):
    """Un-normalized edge-softmax pieces for a dense-mask graph.

    feats: (N, D) float; adj: (N, N) {0,1} with adj[dst, src] = 1 iff edge src->dst.
    Returns (num, den):
        num[v, u] = exp(exp(-|f_u . f_v| / 100)) * adj[v, u]   f32 (N, N)
        den[v]    = sum_u num[v, u]                            f32 (N,)
    so that edge_softmax(u->v) = num[v, u] / den[v].
    """
    n, d = feats.shape
    n_pad = _round_up(max(n, 1), max(_TM, _TN))   # divisible by both _TM and _TN
    d_pad = _round_up(max(d, 1), _FEAT_PAD)

    feats_p = jnp.zeros((n_pad, d_pad), jnp.bfloat16).at[:n, :d].set(
        feats.astype(jnp.bfloat16))
    adj_p = jnp.zeros((n_pad, n_pad), jnp.int8).at[:n, :n].set(adj.astype(jnp.int8))

    grid = (n_pad // _TM, n_pad // _TN)           # (dst tiles, src tiles)
    num, den = pl.pallas_call(
        _distance_kernel,
        out_shape=(
            jax.ShapeDtypeStruct((n_pad, n_pad), jnp.float32),
            jax.ShapeDtypeStruct((n_pad, 1), jnp.float32),
        ),
        grid=grid,
        in_specs=[
            pl.BlockSpec((_TM, d_pad), lambda i, j: (i, 0)),   # dst feats tile
            pl.BlockSpec((_TN, d_pad), lambda i, j: (j, 0)),   # src feats tile
            pl.BlockSpec((_TM, _TN), lambda i, j: (i, j)),     # adjacency tile (int8)
        ],
        out_specs=(
            pl.BlockSpec((_TM, _TN), lambda i, j: (i, j)),     # numerators
            pl.BlockSpec((_TM, 1), lambda i, j: (i, 0)),       # denominators (resident over j)
        ),
        compiler_params=pltpu.CompilerParams(
            # dst axis parallel (megacore on v7x; n_pad//_TM >= 2 by construction),
            # src axis arbitrary (sequential denominator accumulation).
            dimension_semantics=("parallel", "arbitrary"),
            # Headroom below v7x's 64 MiB physical VMEM; also fine on v5e/v6e.
            vmem_limit_bytes=48 * 1024 * 1024,
        ),
    )(feats_p, feats_p, adj_p)
    return num[:n, :n], den[:n, 0]


def distance_forward(feats, src, dst, num_nodes):
    """Equivalent of distance.forward: per-edge softmaxed scores, shape (E,), in
    the same order as the (src, dst) edge list.  Assumes a simple graph (the
    dense 0/1 adjacency mask cannot represent duplicate edges)."""
    adj = jnp.zeros((num_nodes, num_nodes), jnp.int8).at[dst, src].set(1)
    num, den = _distance_dense(feats, adj)
    # Exact normalization + gather on only O(E) values in XLA glue.
    # TODO(synk): fold the per-edge gather into the kernel (scalar-prefetched edge
    #             lists) so only O(E) values hit HBM for very large dense graphs.
    return num[dst, src] / den[dst]


def _reference(feats, src, dst):
    """Pure-numpy reference matching the PyTorch/DGL semantics."""
    feats = np.asarray(feats, np.float32)
    src = np.asarray(src)
    dst = np.asarray(dst)
    dots = np.einsum("ed,ed->e", feats[src], feats[dst])            # u_dot_v
    scores = np.exp(-np.abs(dots) / 100.0)                          # (E,)
    out = np.zeros_like(scores)
    for v in np.unique(dst):
        m = dst == v
        s = scores[m]
        e = np.exp(s - s.max())
        out[m] = e / e.sum()
    return out


if __name__ == "__main__":
    key = jax.random.PRNGKey(0)
    N, D = 8, 32                                   # small graph: 8 nodes, 32-dim feats

    feats = jax.random.normal(key, (N, D), dtype=jnp.float32)

    # Deterministic simple graph: self-loops + ring + a few fixed extra edges.
    src_list = list(range(N)) + [(i + 1) % N for i in range(N)] + [0, 2, 4, 6, 1, 5]
    dst_list = list(range(N)) + list(range(N)) + [3, 5, 1, 3, 7, 0]
    src = jnp.asarray(src_list, jnp.int32)
    dst = jnp.asarray(dst_list, jnp.int32)

    out = distance_forward(feats, src, dst, N)
    out = jax.block_until_ready(out)

    ref = _reference(feats, src, dst)
    # Normalization is exact (plain division).  rtol accounts only for the bf16
    # MXU operands: worst-case |dot| error ~0.1 abs -> < 2e-3 relative on the
    # final softmax values; 5e-3 leaves >2x margin.
    np.testing.assert_allclose(np.asarray(out), ref, rtol=5e-3, atol=1e-6)

    print("KERNEL_OK")
</pallas_src>

<mosaic_0001>
module attributes {stable_mosaic.version = 11 : i64} {
  func.func @_distance_kernel(%arg0: i32, %arg1: i32, %arg2: memref<256x32xbf16, #tpu.memory_space<vmem>>, %arg3: memref<512x32xbf16, #tpu.memory_space<vmem>>, %arg4: memref<256x512xi8, #tpu.memory_space<vmem>>, %arg5: memref<256x512xf32, #tpu.memory_space<vmem>>, %arg6: memref<256x1xf32, #tpu.memory_space<vmem>>) attributes {dimension_semantics = [#tpu.dimension_semantics<parallel>, #tpu.dimension_semantics<arbitrary>], iteration_bounds = array<i64: 2, 1>, scalar_prefetch = 0 : i64, scratch_operands = 0 : i64, tpu.core_type = #tpu.core_type<tc>, window_params = [{transform_indices = @transform_0, window_bounds = array<i64: 256, 32>}, {transform_indices = @transform_1, window_bounds = array<i64: 512, 32>}, {transform_indices = @transform_2, window_bounds = array<i64: 256, 512>}, {transform_indices = @transform_3, window_bounds = array<i64: 256, 512>}, {transform_indices = @transform_4, window_bounds = array<i64: 256, 1>}]} {
    %c0_i32 = arith.constant 0 : i32
    %0 = arith.cmpi eq, %arg1, %c0_i32 : i32
    %1 = arith.extui %0 : i1 to i32
    %c0_i32_0 = arith.constant 0 : i32
    %2 = arith.cmpi ne, %1, %c0_i32_0 : i32
    scf.if %2 {
      %cst_15 = arith.constant 0.000000e+00 : f32
      %22 = vector.broadcast %cst_15 : f32 to vector<256x1xf32>
      %c0_16 = arith.constant 0 : index
      %c0_17 = arith.constant 0 : index
      %23 = vector.load %arg6[%c0_16, %c0_17] : memref<256x1xf32, #tpu.memory_space<vmem>>, vector<256x1xf32>
      tpu.vector_store %arg6[%c0_16, %c0_17], %22 {strides = array<i32>} : memref<256x1xf32, #tpu.memory_space<vmem>>, vector<256x1xf32>,
    } else {
    }
    %c0 = arith.constant 0 : index
    %c0_1 = arith.constant 0 : index
    %3 = vector.load %arg2[%c0, %c0_1] : memref<256x32xbf16, #tpu.memory_space<vmem>>, vector<256x32xbf16>
    %c0_2 = arith.constant 0 : index
    %c0_3 = arith.constant 0 : index
    %4 = vector.load %arg3[%c0_2, %c0_3] : memref<512x32xbf16, #tpu.memory_space<vmem>>, vector<512x32xbf16>
    %cst = arith.constant dense<0.000000e+00> : vector<256x512xf32>
    %5 = tpu.matmul %3, %4, %cst {dimension_numbers = #tpu.dot_dimension_numbers<[1], [1], [0], [0], [0, 0, 1, 0], [], []>} : vector<256x32xbf16>, vector<512x32xbf16>, vector<256x512xf32> -> vector<256x512xf32>
    %6 = math.absf %5 : vector<256x512xf32>
    %cst_4 = arith.constant -0.00999999977 : f32
    %7 = vector.broadcast %cst_4 : f32 to vector<256x512xf32>
    %8 = arith.mulf %6, %7 : vector<256x512xf32>
    %9 = math.exp %8 : vector<256x512xf32>
    %c0_5 = arith.constant 0 : index
    %c0_6 = arith.constant 0 : index
    %10 = vector.load %arg4[%c0_5, %c0_6] : memref<256x512xi8, #tpu.memory_space<vmem>>, vector<256x512xi8>
    %c0_i8 = arith.constant 0 : i8
    %11 = vector.broadcast %c0_i8 : i8 to vector<256x512xi8>
    %12 = arith.cmpi ne, %10, %11 : vector<256x512xi8>
    %13 = math.exp %9 : vector<256x512xf32>
    %cst_7 = arith.constant 0.000000e+00 : f32
    %14 = vector.broadcast %cst_7 : f32 to vector<256x512xf32>
    %15 = arith.select %12, %13, %14 : vector<256x512xi1>, vector<256x512xf32>
    %c0_8 = arith.constant 0 : index
    %c0_9 = arith.constant 0 : index
    %16 = vector.load %arg5[%c0_8, %c0_9] : memref<256x512xf32, #tpu.memory_space<vmem>>, vector<256x512xf32>
    tpu.vector_store %arg5[%c0_8, %c0_9], %15 {strides = array<i32>} : memref<256x512xf32, #tpu.memory_space<vmem>>, vector<256x512xf32>,
    %c0_10 = arith.constant 0 : index
    %c0_11 = arith.constant 0 : index
    %17 = vector.load %arg6[%c0_10, %c0_11] : memref<256x1xf32, #tpu.memory_space<vmem>>, vector<256x1xf32>
    %cst_12 = arith.constant dense<0.000000e+00> : vector<256xf32>
    %18 = vector.multi_reduction <add>, %15, %cst_12 [1] : vector<256x512xf32> to vector<256xf32>
    %19 = vector.shape_cast %18 : vector<256xf32> to vector<256x1xf32>
    %20 = arith.addf %17, %19 : vector<256x1xf32>
    %c0_13 = arith.constant 0 : index
    %c0_14 = arith.constant 0 : index
    %21 = vector.load %arg6[%c0_13, %c0_14] : memref<256x1xf32, #tpu.memory_space<vmem>>, vector<256x1xf32>
    tpu.vector_store %arg6[%c0_13, %c0_14], %20 {strides = array<i32>} : memref<256x1xf32, #tpu.memory_space<vmem>>, vector<256x1xf32>,
    return
  }
  func.func @transform_0(%arg0: i32, %arg1: i32) -> (i32, i32) {
    %c0_i32 = arith.constant 0 : i32
    %c0_i32_0 = arith.constant 0 : i32
    return %arg0, %c0_i32 : i32, i32
  }
  func.func @transform_1(%arg0: i32, %arg1: i32) -> (i32, i32) {
    %c0_i32 = arith.constant 0 : i32
    %c0_i32_0 = arith.constant 0 : i32
    return %arg1, %c0_i32 : i32, i32
  }
  func.func @transform_2(%arg0: i32, %arg1: i32) -> (i32, i32) {
    %c0_i32 = arith.constant 0 : i32
    return %arg0, %arg1 : i32, i32
  }
  func.func @transform_3(%arg0: i32, %arg1: i32) -> (i32, i32) {
    %c0_i32 = arith.constant 0 : i32
    return %arg0, %arg1 : i32, i32
  }
  func.func @transform_4(%arg0: i32, %arg1: i32) -> (i32, i32) {
    %c0_i32 = arith.constant 0 : i32
    %c0_i32_0 = arith.constant 0 : i32
    return %arg0, %c0_i32 : i32, i32
  }
}

</mosaic_0001>

<llo_original>
// kernel: _distance_dense.1
$region0: #{_distance_dense.1}
  #allocation0 [shape = 'u32[]', space=smem, size = 0x4, offset = 0x4, fixed_abs, tag = 'smem constant byte address 0x4 - core index']
  #allocation1 [shape = 'u32[144,128]{1,0:T(1,128)}', space=vmem, size = 0x12000, scoped, tag = 'internal scratch']
  %s0 = inlined_call_operand.vmem [shape: bf16[512,32], index: 0, kind: input, shape index: {}, may-alias: {0,1}]
  %s1 = inlined_call_operand.vmem [shape: bf16[512,32], index: 1, kind: input, shape index: {}, may-alias: {0,1}]
  %s2 = inlined_call_operand.vmem [shape: s8[512,512], index: 2, kind: input, shape index: {}]
  %s3 = inlined_call_operand.vmem [shape: f32[512,512], index: 3, kind: output, shape index: {0}]
  %s4 = inlined_call_operand.vmem [shape: f32[512,1], index: 4, kind: output, shape index: {1}]
  %5 = xla_tuple %s3, %s4
  %s6 = sld [smem:[#allocation0]]
  $region57: #{_distance_dense.1} parent=0
    _
  %s8 = ssub.s32 1, %s6
  %s9 = scalar_select 0, %s8, %s6
  loop: start=0, step=1, limit=4
  $region2: #{_distance_dense.1} parent=0 // loop_pre_header
    _
  $region3: #{_distance_dense.1} parent=0 // loop_header
    %s11 = sphi 0, %s15
    %p12 = scmp.ge.s32.totalorder %s11, 4
    %s18 = sphi 0, %s30
    %s19 = sphi 0, %s26
    %s20 = sphi 0, %s18
    %s21 = sphi 0, %s19
    %s22 = sphi 0, %s20
    %s23 = sphi 0, %s21
    %s33 = sphi 0, %s35
    %s36 = sphi 0, %s33
    %s37 = sphi 0, %s36
    %s53 = sphi 0, %s37
    %s59 = sphi 0, %s61
    %s62 = sphi 0, %s59
    %s63 = sphi 0, %s62
    %s79 = sphi 0, %s63
    %s87 = sphi 0, %s89
    %s90 = sphi 0, %s87
    %s91 = sphi 0, %s90
    %s107 = sphi 0, %s91
    %s115 = sphi 0, %s117
    %s118 = sphi 0, %s115
    %s119 = sphi 0, %s118
    %s135 = sphi 0, %s119
    %s141 = sphi 0, %s143
    %s144 = sphi 0, %s141
    %s145 = sphi 0, %s144
    %s161 = sphi 0, %s145
  $region4: #{_distance_dense.1} parent=0 // loop_header_branch
    %14 = sbr.rel (%p12) target = $region8
  $region5: #{_distance_dense.1} parent=0 // loop_body
    %s16 = ssub.s32 %s11, 1
    %s17 = ssub.s32 %s11, 2
    %s24 = sadd.s32 1, %s19
    %p25 = scmp.ge.s32.totalorder %s24, 1
    %s26 = scalar_select %p25, 0, %s24
    %s27 = sadd.s32 1, %s18
    %s28 = scalar_select %p25, %s27, %s18
    %p29 = scmp.ge.s32.totalorder %s28, 2
    %s30 = scalar_select %p29, 0, %s28
    %s31 = ssub.s32 %s18, %s30
    %p32 = scmp.eq.s32.totalorder %s31, 0
    %s34 = sadd.s32 %s33, 1
    %s35 = scalar_select %p32, %s33, %s34
    %p38 = pneg %p32
    %p39 = scmp.eq.s32.totalorder %s11, 1
    %p40 = por %p38, %p39
    %p41 = scmp.ne.s32.totalorder %s33, %s36
    %p42 = scmp.eq.s32.totalorder %s11, 0
    %p43 = por %p41, %p42
    %p44 = scmp.ne.s32.totalorder %s33, %s36
    %p45 = scmp.eq.s32.totalorder %s16, 1
    %p46 = por %p44, %p45
    %p47 = scmp.ne.s32.totalorder %s36, %s37
    %p48 = scmp.eq.s32.totalorder %s16, 0
    %p49 = por %p47, %p48
    %p50 = scmp.ne.s32.totalorder %s36, %s37
    %p51 = scmp.eq.s32.totalorder %s17, 1
    %p52 = por %p50, %p51
    %p54 = scmp.ne.s32.totalorder %s37, %s53
    %p55 = scmp.eq.s32.totalorder %s17, 0
    %p56 = por %p54, %p55
    %s57 = ssub.s32 %s19, %s26
    %p58 = scmp.eq.s32.totalorder %s57, 0
    %s60 = sadd.s32 %s59, 1
    %s61 = scalar_select %p58, %s59, %s60
    %p64 = pneg %p58
    %p65 = scmp.eq.s32.totalorder %s11, 1
    %p66 = por %p64, %p65
    %p67 = scmp.ne.s32.totalorder %s59, %s62
    %p68 = scmp.eq.s32.totalorder %s11, 0
    %p69 = por %p67, %p68
    %p70 = scmp.ne.s32.totalorder %s59, %s62
    %p71 = scmp.eq.s32.totalorder %s16, 1
    %p72 = por %p70, %p71
    %p73 = scmp.ne.s32.totalorder %s62, %s63
    %p74 = scmp.eq.s32.totalorder %s16, 0
    %p75 = por %p73, %p74
    %p76 = scmp.ne.s32.totalorder %s62, %s63
    %p77 = scmp.eq.s32.totalorder %s17, 1
    %p78 = por %p76, %p77
    %p80 = scmp.ne.s32.totalorder %s63, %s79
    %p81 = scmp.eq.s32.totalorder %s17, 0
    %p82 = por %p80, %p81
    %s83 = ssub.s32 %s18, %s30
    %s84 = ssub.s32 %s19, %s26
    %s85 = sor.u32 %s83, %s84
    %p86 = scmp.eq.s32.totalorder %s85, 0
    %s88 = sadd.s32 %s87, 1
    %s89 = scalar_select %p86, %s87, %s88
    %p92 = pneg %p86
    %p93 = scmp.eq.s32.totalorder %s11, 1
    %p94 = por %p92, %p93
    %p95 = scmp.ne.s32.totalorder %s87, %s90
    %p96 = scmp.eq.s32.totalorder %s11, 0
    %p97 = por %p95, %p96
    %p98 = scmp.ne.s32.totalorder %s87, %s90
    %p99 = scmp.eq.s32.totalorder %s16, 1
    %p100 = por %p98, %p99
    %p101 = scmp.ne.s32.totalorder %s90, %s91
    %p102 = scmp.eq.s32.totalorder %s16, 0
    %p103 = por %p101, %p102
    %p104 = scmp.ne.s32.totalorder %s90, %s91
    %p105 = scmp.eq.s32.totalorder %s17, 1
    %p106 = por %p104, %p105
    %p108 = scmp.ne.s32.totalorder %s91, %s107
    %p109 = scmp.eq.s32.totalorder %s17, 0
    %p110 = por %p108, %p109
    %s111 = ssub.s32 %s18, %s30
    %s112 = ssub.s32 %s19, %s26
    %s113 = sor.u32 %s111, %s112
    %p114 = scmp.eq.s32.totalorder %s113, 0
    %s116 = sadd.s32 %s115, 1
    %s117 = scalar_select %p114, %s115, %s116
    %p120 = pneg %p114
    %p121 = scmp.eq.s32.totalorder %s11, 1
    %p122 = por %p120, %p121
    %p123 = scmp.ne.s32.totalorder %s115, %s118
    %p124 = scmp.eq.s32.totalorder %s11, 0
    %p125 = por %p123, %p124
    %p126 = scmp.ne.s32.totalorder %s115, %s118
    %p127 = scmp.eq.s32.totalorder %s16, 1
    %p128 = por %p126, %p127
    %p129 = scmp.ne.s32.totalorder %s118, %s119
    %p130 = scmp.eq.s32.totalorder %s16, 0
    %p131 = por %p129, %p130
    %p132 = scmp.ne.s32.totalorder %s118, %s119
    %p133 = scmp.eq.s32.totalorder %s17, 1
    %p134 = por %p132, %p133
    %p136 = scmp.ne.s32.totalorder %s119, %s135
    %p137 = scmp.eq.s32.totalorder %s17, 0
    %p138 = por %p136, %p137
    %s139 = ssub.s32 %s18, %s30
    %p140 = scmp.eq.s32.totalorder %s139, 0
    %s142 = sadd.s32 %s141, 1
    %s143 = scalar_select %p140, %s141, %s142
    %p146 = pneg %p140
    %p147 = scmp.eq.s32.totalorder %s11, 1
    %p148 = por %p146, %p147
    %p149 = scmp.ne.s32.totalorder %s141, %s144
    %p150 = scmp.eq.s32.totalorder %s11, 0
    %p151 = por %p149, %p150
    %p152 = scmp.ne.s32.totalorder %s141, %s144
    %p153 = scmp.eq.s32.totalorder %s16, 1
    %p154 = por %p152, %p153
    %p155 = scmp.ne.s32.totalorder %s144, %s145
    %p156 = scmp.eq.s32.totalorder %s16, 0
    %p157 = por %p155, %p156
    %p158 = scmp.ne.s32.totalorder %s144, %s145
    %p159 = scmp.eq.s32.totalorder %s17, 1
    %p160 = por %p158, %p159
    %p162 = scmp.ne.s32.totalorder %s145, %s161
    %p163 = scmp.eq.s32.totalorder %s17, 0
    %p164 = por %p162, %p163
    %p165 = scmp.le.s32.totalorder 1, %s11
    %p166 = scmp.lt.s32.totalorder %s11, 3
    %p167 = pnand %p165, %p166
    %p168 = pneg %p167
    // Predicated region
    $region9: #{_distance_dense.1} parent=5 // pred_check
      _
    $region10: #{_distance_dense.1} parent=5 // pred_check_branch
      %170 = sbr.rel (%p167) target = $region12
    $region11: #{_distance_dense.1} parent=5 // pred_region
      %s171 = ssub.s32 %s11, 1
      // Predicated region
      $region13: #{_distance_dense.1} parent=11 // pred_check
        %p172 = pneg %p75
      $region14: #{_distance_dense.1} parent=11 // pred_check_branch
        %174 = sbr.rel (%p172) target = $region16
      $region15: #{_distance_dense.1} parent=11 // pred_region
        %s175 = smul.u32 64, %s21
        %p176 = scmp.lt.s32.totalorder %s175, 63
        %s177 = scalar_select %p176, %s175, 63
        %s178 = smul.addr %s177, 4
        %s179 = scalar_lea.vmem %s1, %s178
        %s180 = smul.u32 64, %s21
      $region16: #{_distance_dense.1} parent=11 // pred_fallthru
        _
    $region12: #{_distance_dense.1} parent=5 // pred_fallthru
      _
    %p181 = scmp.lt.s32.totalorder %s11, 2
    // Predicated region
    $region17: #{_distance_dense.1} parent=5 // pred_check
      %p182 = pneg %p181
    $region18: #{_distance_dense.1} parent=5 // pred_check_branch
      %184 = sbr.rel (%p182) target = $region20
    $region19: #{_distance_dense.1} parent=5 // pred_region
      // Predicated region
      $region21: #{_distance_dense.1} parent=19 // pred_check
        %p185 = pneg %p43
      $region22: #{_distance_dense.1} parent=19 // pred_check_branch
        %187 = sbr.rel (%p185) target = $region24
      $region23: #{_distance_dense.1} parent=19 // pred_region
        %s188 = smul.u32 32, %s18
        %p189 = scmp.lt.s32.totalorder %s188, 63
        %s190 = scalar_select %p189, %s188, 63
        %s191 = smul.addr %s190, 4
        %s192 = scalar_lea.vmem %s0, %s191
        %s193 = smul.u32 32, %s18
      $region24: #{_distance_dense.1} parent=19 // pred_fallthru
        _
      // Predicated region
      $region25: #{_distance_dense.1} parent=19 // pred_check
        %p194 = pneg %p97
      $region26: #{_distance_dense.1} parent=19 // pred_check_branch
        %196 = sbr.rel (%p194) target = $region28
      $region27: #{_distance_dense.1} parent=19 // pred_region
        %s197 = smul.u32 8, %s18
        %s198 = smul.u32 4, %s19
        %p199 = scmp.lt.s32.totalorder %s197, 15
        %s200 = scalar_select %p199, %s197, 15
        %p201 = scmp.lt.s32.totalorder %s198, 3
        %s202 = scalar_select %p201, %s198, 3
        %s203 = smul.addr %s200, 4
        %s204 = sadd.s32 %s202, %s203
        %s205 = smul.addr %s204, 8
        %s206 = scalar_lea.vmem %s2, %s205
        %s207 = smul.u32 8, %s18
        %s208 = smul.u32 4, %s19
      $region28: #{_distance_dense.1} parent=19 // pred_fallthru
        _
    $region20: #{_distance_dense.1} parent=5 // pred_fallthru
      _
    %p209 = scmp.le.s32.totalorder 1, %s11
    %p210 = scmp.lt.s32.totalorder %s11, 3
    %p211 = pnand %p209, %p210
    %p212 = pneg %p211
    // Predicated region
    $region29: #{_distance_dense.1} parent=5 // pred_check
      _
    $region30: #{_distance_dense.1} parent=5 // pred_check_branch
      %214 = sbr.rel (%p211) target = $region32
    $region31: #{_distance_dense.1} parent=5 // pred_region
      %s215 = ssub.s32 %s11, 1
      %s216 = smul.u32 32, %s20
      %p217 = scmp.lt.s32.totalorder %s216, 63
      %s218 = scalar_select %p217, %s216, 63
      %s219 = smul.addr %s218, 4
      %s220 = scalar_lea.vmem %s0, %s219
      %p221 = pneg %p49
      %p222 = pneg %p46
      %s223 = smul.u32 64, %s21
      %p224 = scmp.lt.s32.totalorder %s223, 63
      %s225 = scalar_select %p224, %s223, 63
      %s226 = smul.addr %s225, 4
      %s227 = scalar_lea.vmem %s1, %s226
      %p228 = pneg %p75
      %p229 = pneg %p72
      %s230 = smul.u32 8, %s20
      %s231 = smul.u32 4, %s21
      %p232 = scmp.lt.s32.totalorder %s230, 15
      %s233 = scalar_select %p232, %s230, 15
      %p234 = scmp.lt.s32.totalorder %s231, 3
      %s235 = scalar_select %p234, %s231, 3
      %s236 = smul.addr %s233, 4
      %s237 = sadd.s32 %s235, %s236
      %s238 = smul.addr %s237, 8
      %s239 = scalar_lea.vmem %s2, %s238
      %p240 = pneg %p103
      %p241 = pneg %p100
      %p242 = pneg %p131
      %p243 = pneg %p128
      %s244 = smul.u32 32, %s20
      %s245 = smul.u32 4, %s21
      %p246 = scmp.lt.s32.totalorder %s244, 63
      %s247 = scalar_select %p246, %s244, 63
      %p248 = scmp.lt.s32.totalorder %s245, 3
      %s249 = scalar_select %p248, %s245, 3
      %s250 = smul.addr %s247, 4
      %s251 = sadd.s32 %s249, %s250
      %s252 = smul.addr %s251, 8
      %s253 = scalar_lea.vmem %s3, %s252
      %p254 = pneg %p157
      %p255 = pneg %p154
      %s256 = smul.u32 32, %s20
      %p257 = scmp.lt.s32.totalorder %s256, 63
      %s258 = scalar_select %p257, %s256, 63
      %s259 = smul.addr %s258, 8
      %s260 = scalar_lea.vmem %s4, %s259
      %s261 = smul.u32 32, %s20
      %p262 = scmp.lt.s32.totalorder %s261, 63
      %s263 = scalar_select %p262, %s261, 63
      %s264 = smul.addr %s263, 4
      %s265 = scalar_lea.vmem %s0, %s264
      %s266 = smul.u32 32, %s20
      %s267 = smul.u32 64, %s21
      %p268 = scmp.lt.s32.totalorder %s267, 63
      %s269 = scalar_select %p268, %s267, 63
      %s270 = smul.addr %s269, 4
      %s271 = scalar_lea.vmem %s1, %s270
      %s272 = smul.u32 64, %s21
      %s273 = smul.u32 8, %s20
      %s274 = smul.u32 4, %s21
      %p275 = scmp.lt.s32.totalorder %s273, 15
      %s276 = scalar_select %p275, %s273, 15
      %p277 = scmp.lt.s32.totalorder %s274, 3
      %s278 = scalar_select %p277, %s274, 3
      %s279 = smul.addr %s276, 4
      %s280 = sadd.s32 %s278, %s279
      %s281 = smul.addr %s280, 8
      %s282 = scalar_lea.vmem %s2, %s281
      %s283 = smul.u32 8, %s20
      %s284 = smul.u32 4, %s21
      %s285 = smul.u32 32, %s20
      %s286 = smul.u32 4, %s21
      %p287 = scmp.lt.s32.totalorder %s285, 63
      %s288 = scalar_select %p287, %s285, 63
      %p289 = scmp.lt.s32.totalorder %s286, 3
      %s290 = scalar_select %p289, %s286, 3
      %s291 = smul.addr %s288, 4
      %s292 = sadd.s32 %s290, %s291
      %s293 = smul.addr %s292, 8
      %s294 = scalar_lea.vmem %s3, %s293
      %s295 = smul.u32 32, %s20
      %s296 = smul.u32 4, %s21
      %s297 = smul.u32 32, %s20
      %p298 = scmp.lt.s32.totalorder %s297, 63
      %s299 = scalar_select %p298, %s297, 63
      %s300 = smul.addr %s299, 8
      %s301 = scalar_lea.vmem %s4, %s300
      %s302 = smul.u32 32, %s20
      %p306 = scmp.eq.s32.totalorder %s21, 0
      // Predicated region
      $region33: #{_distance_dense.1} parent=31 // pred_check
        %p307 = pneg %p306
      $region34: #{_distance_dense.1} parent=31 // pred_check_branch
        %309 = sbr.rel (%p307) target = $region36
      $region35: #{_distance_dense.1} parent=31 // pred_region
        %vm310 = vcmask 7168
        %311 = vst.msk [vmem:[%s301] sm:$0xff] %vm310, 0.0
        %312 = vst.msk [vmem:[%s301 + $0x8] sm:$0xff] %vm310, 0.0
        %313 = vst.msk [vmem:[%s301 + $0x10] sm:$0xff] %vm310, 0.0
        %314 = vst.msk [vmem:[%s301 + $0x18] sm:$0xff] %vm310, 0.0
        %315 = vst.msk [vmem:[%s301 + $0x20] sm:$0xff] %vm310, 0.0
        %316 = vst.msk [vmem:[%s301 + $0x28] sm:$0xff] %vm310, 0.0
        %317 = vst.msk [vmem:[%s301 + $0x30] sm:$0xff] %vm310, 0.0
        %318 = vst.msk [vmem:[%s301 + $0x38] sm:$0xff] %vm310, 0.0
        %319 = vst.msk [vmem:[%s301 + $0x40] sm:$0xff] %vm310, 0.0
        %320 = vst.msk [vmem:[%s301 + $0x48] sm:$0xff] %vm310, 0.0
        %321 = vst.msk [vmem:[%s301 + $0x50] sm:$0xff] %vm310, 0.0
        %322 = vst.msk [vmem:[%s301 + $0x58] sm:$0xff] %vm310, 0.0
        %323 = vst.msk [vmem:[%s301 + $0x60] sm:$0xff] %vm310, 0.0
        %324 = vst.msk [vmem:[%s301 + $0x68] sm:$0xff] %vm310, 0.0
        %325 = vst.msk [vmem:[%s301 + $0x70] sm:$0xff] %vm310, 0.0
        %326 = vst.msk [vmem:[%s301 + $0x78] sm:$0xff] %vm310, 0.0
        %327 = vst.msk [vmem:[%s301 + $0x80] sm:$0xff] %vm310, 0.0
        %328 = vst.msk [vmem:[%s301 + $0x88] sm:$0xff] %vm310, 0.0
        %329 = vst.msk [vmem:[%s301 + $0x90] sm:$0xff] %vm310, 0.0
        %330 = vst.msk [vmem:[%s301 + $0x98] sm:$0xff] %vm310, 0.0
        %331 = vst.msk [vmem:[%s301 + $0xa0] sm:$0xff] %vm310, 0.0
        %332 = vst.msk [vmem:[%s301 + $0xa8] sm:$0xff] %vm310, 0.0
        %333 = vst.msk [vmem:[%s301 + $0xb0] sm:$0xff] %vm310, 0.0
        %334 = vst.msk [vmem:[%s301 + $0xb8] sm:$0xff] %vm310, 0.0
        %335 = vst.msk [vmem:[%s301 + $0xc0] sm:$0xff] %vm310, 0.0
        %336 = vst.msk [vmem:[%s301 + $0xc8] sm:$0xff] %vm310, 0.0
        %337 = vst.msk [vmem:[%s301 + $0xd0] sm:$0xff] %vm310, 0.0
        %338 = vst.msk [vmem:[%s301 + $0xd8] sm:$0xff] %vm310, 0.0
        %339 = vst.msk [vmem:[%s301 + $0xe0] sm:$0xff] %vm310, 0.0
        %340 = vst.msk [vmem:[%s301 + $0xe8] sm:$0xff] %vm310, 0.0
        %341 = vst.msk [vmem:[%s301 + $0xf0] sm:$0xff] %vm310, 0.0
        %342 = vst.msk [vmem:[%s301 + $0xf8] sm:$0xff] %vm310, 0.0
      $region36: #{_distance_dense.1} parent=31 // pred_fallthru
        _
      %v343 = vld [vmem:[%s265] sm:$0xf]
      %v344 = vld [vmem:[%s265 + $0x4] sm:$0xf]
      %v345 = vld [vmem:[%s265 + $0x8] sm:$0xf]
      %v346 = vld [vmem:[%s265 + $0xc] sm:$0xf]
      %v347 = vld [vmem:[%s265 + $0x10] sm:$0xf]
      %v348 = vld [vmem:[%s265 + $0x14] sm:$0xf]
      %v349 = vld [vmem:[%s265 + $0x18] sm:$0xf]
      %v350 = vld [vmem:[%s265 + $0x1c] sm:$0xf]
      %v351 = vld [vmem:[%s265 + $0x20] sm:$0xf]
      %v352 = vld [vmem:[%s265 + $0x24] sm:$0xf]
      %v353 = vld [vmem:[%s265 + $0x28] sm:$0xf]
      %v354 = vld [vmem:[%s265 + $0x2c] sm:$0xf]
      %v355 = vld [vmem:[%s265 + $0x30] sm:$0xf]
      %v356 = vld [vmem:[%s265 + $0x34] sm:$0xf]
      %v357 = vld [vmem:[%s265 + $0x38] sm:$0xf]
      %v358 = vld [vmem:[%s265 + $0x3c] sm:$0xf]
      %v359 = vld [vmem:[%s265 + $0x40] sm:$0xf]
      %v360 = vld [vmem:[%s265 + $0x44] sm:$0xf]
      %v361 = vld [vmem:[%s265 + $0x48] sm:$0xf]
      %v362 = vld [vmem:[%s265 + $0x4c] sm:$0xf]
      %v363 = vld [vmem:[%s265 + $0x50] sm:$0xf]
      %v364 = vld [vmem:[%s265 + $0x54] sm:$0xf]
      %v365 = vld [vmem:[%s265 + $0x58] sm:$0xf]
      %v366 = vld [vmem:[%s265 + $0x5c] sm:$0xf]
      %v367 = vld [vmem:[%s265 + $0x60] sm:$0xf]
      %v368 = vld [vmem:[%s265 + $0x64] sm:$0xf]
      %v369 = vld [vmem:[%s265 + $0x68] sm:$0xf]
      %v370 = vld [vmem:[%s265 + $0x6c] sm:$0xf]
      %v371 = vld [vmem:[%s265 + $0x70] sm:$0xf]
      %v372 = vld [vmem:[%s265 + $0x74] sm:$0xf]
      %v373 = vld [vmem:[%s265 + $0x78] sm:$0xf]
      %v374 = vld [vmem:[%s265 + $0x7c] sm:$0xf]
      %v375 = vld [vmem:[%s271] sm:$0xf]
      %v376 = vld [vmem:[%s271 + $0x4] sm:$0xf]
      %v377 = vld [vmem:[%s271 + $0x8] sm:$0xf]
      %v378 = vld [vmem:[%s271 + $0xc] sm:$0xf]
      %v379 = vld [vmem:[%s271 + $0x10] sm:$0xf]
      %v380 = vld [vmem:[%s271 + $0x14] sm:$0xf]
      %v381 = vld [vmem:[%s271 + $0x18] sm:$0xf]
      %v382 = vld [vmem:[%s271 + $0x1c] sm:$0xf]
      %v383 = vld [vmem:[%s271 + $0x20] sm:$0xf]
      %v384 = vld [vmem:[%s271 + $0x24] sm:$0xf]
      %v385 = vld [vmem:[%s271 + $0x28] sm:$0xf]
      %v386 = vld [vmem:[%s271 + $0x2c] sm:$0xf]
      %v387 = vld [vmem:[%s271 + $0x30] sm:$0xf]
      %v388 = vld [vmem:[%s271 + $0x34] sm:$0xf]
      %v389 = vld [vmem:[%s271 + $0x38] sm:$0xf]
      %v390 = vld [vmem:[%s271 + $0x3c] sm:$0xf]
      %v391 = vld [vmem:[%s271 + $0x40] sm:$0xf]
      %v392 = vld [vmem:[%s271 + $0x44] sm:$0xf]
      %v393 = vld [vmem:[%s271 + $0x48] sm:$0xf]
      %v394 = vld [vmem:[%s271 + $0x4c] sm:$0xf]
      %v395 = vld [vmem:[%s271 + $0x50] sm:$0xf]
      %v396 = vld [vmem:[%s271 + $0x54] sm:$0xf]
      %v397 = vld [vmem:[%s271 + $0x58] sm:$0xf]
      %v398 = vld [vmem:[%s271 + $0x5c] sm:$0xf]
      %v399 = vld [vmem:[%s271 + $0x60] sm:$0xf]
      %v400 = vld [vmem:[%s271 + $0x64] sm:$0xf]
      %v401 = vld [vmem:[%s271 + $0x68] sm:$0xf]
      %v402 = vld [vmem:[%s271 + $0x6c] sm:$0xf]
      %v403 = vld [vmem:[%s271 + $0x70] sm:$0xf]
      %v404 = vld [vmem:[%s271 + $0x74] sm:$0xf]
      %v405 = vld [vmem:[%s271 + $0x78] sm:$0xf]
      %v406 = vld [vmem:[%s271 + $0x7c] sm:$0xf]
      %v407 = vld [vmem:[%s271 + $0x80] sm:$0xf]
      %v408 = vld [vmem:[%s271 + $0x84] sm:$0xf]
      %v409 = vld [vmem:[%s271 + $0x88] sm:$0xf]
      %v410 = vld [vmem:[%s271 + $0x8c] sm:$0xf]
      %v411 = vld [vmem:[%s271 + $0x90] sm:$0xf]
      %v412 = vld [vmem:[%s271 + $0x94] sm:$0xf]
      %v413 = vld [vmem:[%s271 + $0x98] sm:$0xf]
      %v414 = vld [vmem:[%s271 + $0x9c] sm:$0xf]
      %v415 = vld [vmem:[%s271 + $0xa0] sm:$0xf]
      %v416 = vld [vmem:[%s271 + $0xa4] sm:$0xf]
      %v417 = vld [vmem:[%s271 + $0xa8] sm:$0xf]
      %v418 = vld [vmem:[%s271 + $0xac] sm:$0xf]
      %v419 = vld [vmem:[%s271 + $0xb0] sm:$0xf]
      %v420 = vld [vmem:[%s271 + $0xb4] sm:$0xf]
      %v421 = vld [vmem:[%s271 + $0xb8] sm:$0xf]
      %v422 = vld [vmem:[%s271 + $0xbc] sm:$0xf]
      %v423 = vld [vmem:[%s271 + $0xc0] sm:$0xf]
      %v424 = vld [vmem:[%s271 + $0xc4] sm:$0xf]
      %v425 = vld [vmem:[%s271 + $0xc8] sm:$0xf]
      %v426 = vld [vmem:[%s271 + $0xcc] sm:$0xf]
      %v427 = vld [vmem:[%s271 + $0xd0] sm:$0xf]
      %v428 = vld [vmem:[%s271 + $0xd4] sm:$0xf]
      %v429 = vld [vmem:[%s271 + $0xd8] sm:$0xf]
      %v430 = vld [vmem:[%s271 + $0xdc] sm:$0xf]
      %v431 = vld [vmem:[%s271 + $0xe0] sm:$0xf]
      %v432 = vld [vmem:[%s271 + $0xe4] sm:$0xf]
      %v433 = vld [vmem:[%s271 + $0xe8] sm:$0xf]
      %v434 = vld [vmem:[%s271 + $0xec] sm:$0xf]
      %v435 = vld [vmem:[%s271 + $0xf0] sm:$0xf]
      %v436 = vld [vmem:[%s271 + $0xf4] sm:$0xf]
      %v437 = vld [vmem:[%s271 + $0xf8] sm:$0xf]
      %v438 = vld [vmem:[%s271 + $0xfc] sm:$0xf]
      %v471 = vunpack.c.l.b16 %v343
      %v472 = vunpack.c.l.b16 %v344
      %v473 = vunpack.c.l.b16 %v345
      %v474 = vunpack.c.l.b16 %v346
      %v475 = vunpack.c.l.b16 %v347
      %v476 = vunpack.c.l.b16 %v348
      %v477 = vunpack.c.l.b16 %v349
      %v478 = vunpack.c.l.b16 %v350
      %v479 = vunpack.c.l.b16 %v351
      %v480 = vunpack.c.l.b16 %v352
      %v481 = vunpack.c.l.b16 %v353
      %v482 = vunpack.c.l.b16 %v354
      %v483 = vunpack.c.l.b16 %v355
      %v484 = vunpack.c.l.b16 %v356
      %v485 = vunpack.c.l.b16 %v357
      %v486 = vunpack.c.l.b16 %v358
      %v487 = vunpack.c.l.b16 %v359
      %v488 = vunpack.c.l.b16 %v360
      %v489 = vunpack.c.l.b16 %v361
      %v490 = vunpack.c.l.b16 %v362
      %v491 = vunpack.c.l.b16 %v363
      %v492 = vunpack.c.l.b16 %v364
      %v493 = vunpack.c.l.b16 %v365
      %v494 = vunpack.c.l.b16 %v366
      %v495 = vunpack.c.l.b16 %v367
      %v496 = vunpack.c.l.b16 %v368
      %v497 = vunpack.c.l.b16 %v369
      %v498 = vunpack.c.l.b16 %v370
      %v499 = vunpack.c.l.b16 %v371
      %v500 = vunpack.c.l.b16 %v372
      %v501 = vunpack.c.l.b16 %v373
      %v502 = vunpack.c.l.b16 %v374
      %v503 = vpack.c.b16 %v472, %v471
      %v504 = vpack.c.b16 %v474, %v473
      %v505 = vpack.c.b16 %v476, %v475
      %v506 = vpack.c.b16 %v478, %v477
      %v507 = vpack.c.b16 %v480, %v479
      %v508 = vpack.c.b16 %v482, %v481
      %v509 = vpack.c.b16 %v484, %v483
      %v510 = vpack.c.b16 %v486, %v485
      %v511 = vpack.c.b16 %v488, %v487
      %v512 = vpack.c.b16 %v490, %v489
      %v513 = vpack.c.b16 %v492, %v491
      %v514 = vpack.c.b16 %v494, %v493
      %v515 = vpack.c.b16 %v496, %v495
      %v516 = vpack.c.b16 %v498, %v497
      %v517 = vpack.c.b16 %v500, %v499
      %v518 = vpack.c.b16 %v502, %v501
      %v583 = vunpack.c.l.b16 %v375
      %v584 = vunpack.c.l.b16 %v376
      %v585 = vunpack.c.l.b16 %v377
      %v586 = vunpack.c.l.b16 %v378
      %v587 = vunpack.c.l.b16 %v379
      %v588 = vunpack.c.l.b16 %v380
      %v589 = vunpack.c.l.b16 %v381
      %v590 = vunpack.c.l.b16 %v382
      %v591 = vunpack.c.l.b16 %v383
      %v592 = vunpack.c.l.b16 %v384
      %v593 = vunpack.c.l.b16 %v385
      %v594 = vunpack.c.l.b16 %v386
      %v595 = vunpack.c.l.b16 %v387
      %v596 = vunpack.c.l.b16 %v388
      %v597 = vunpack.c.l.b16 %v389
      %v598 = vunpack.c.l.b16 %v390
      %v599 = vunpack.c.l.b16 %v391
      %v600 = vunpack.c.l.b16 %v392
      %v601 = vunpack.c.l.b16 %v393
      %v602 = vunpack.c.l.b16 %v394
      %v603 = vunpack.c.l.b16 %v395
      %v604 = vunpack.c.l.b16 %v396
      %v605 = vunpack.c.l.b16 %v397
      %v606 = vunpack.c.l.b16 %v398
      %v607 = vunpack.c.l.b16 %v399
      %v608 = vunpack.c.l.b16 %v400
      %v609 = vunpack.c.l.b16 %v401
      %v610 = vunpack.c.l.b16 %v402
      %v611 = vunpack.c.l.b16 %v403
      %v612 = vunpack.c.l.b16 %v404
      %v613 = vunpack.c.l.b16 %v405
      %v614 = vunpack.c.l.b16 %v406
      %v615 = vunpack.c.l.b16 %v407
      %v616 = vunpack.c.l.b16 %v408
      %v617 = vunpack.c.l.b16 %v409
      %v618 = vunpack.c.l.b16 %v410
      %v619 = vunpack.c.l.b16 %v411
      %v620 = vunpack.c.l.b16 %v412
      %v621 = vunpack.c.l.b16 %v413
      %v622 = vunpack.c.l.b16 %v414
      %v623 = vunpack.c.l.b16 %v415
      %v624 = vunpack.c.l.b16 %v416
      %v625 = vunpack.c.l.b16 %v417
      %v626 = vunpack.c.l.b16 %v418
      %v627 = vunpack.c.l.b16 %v419
      %v628 = vunpack.c.l.b16 %v420
      %v629 = vunpack.c.l.b16 %v421
      %v630 = vunpack.c.l.b16 %v422
      %v631 = vunpack.c.l.b16 %v423
      %v632 = vunpack.c.l.b16 %v424
      %v633 = vunpack.c.l.b16 %v425
      %v634 = vunpack.c.l.b16 %v426
      %v635 = vunpack.c.l.b16 %v427
      %v636 = vunpack.c.l.b16 %v428
      %v637 = vunpack.c.l.b16 %v429
      %v638 = vunpack.c.l.b16 %v430
      %v639 = vunpack.c.l.b16 %v431
      %v640 = vunpack.c.l.b16 %v432
      %v641 = vunpack.c.l.b16 %v433
      %v642 = vunpack.c.l.b16 %v434
      %v643 = vunpack.c.l.b16 %v435
      %v644 = vunpack.c.l.b16 %v436
      %v645 = vunpack.c.l.b16 %v437
      %v646 = vunpack.c.l.b16 %v438
      %v647 = vpack.c.b16 %v584, %v583
      %v648 = vpack.c.b16 %v586, %v585
      %v649 = vpack.c.b16 %v588, %v587
      %v650 = vpack.c.b16 %v590, %v589
      %v651 = vpack.c.b16 %v592, %v591
      %v652 = vpack.c.b16 %v594, %v593
      %v653 = vpack.c.b16 %v596, %v595
      %v654 = vpack.c.b16 %v598, %v597
      %v655 = vpack.c.b16 %v600, %v599
      %v656 = vpack.c.b16 %v602, %v601
      %v657 = vpack.c.b16 %v604, %v603
      %v658 = vpack.c.b16 %v606, %v605
      %v659 = vpack.c.b16 %v608, %v607
      %v660 = vpack.c.b16 %v610, %v609
      %v661 = vpack.c.b16 %v612, %v611
      %v662 = vpack.c.b16 %v614, %v613
      %v663 = vpack.c.b16 %v616, %v615
      %v664 = vpack.c.b16 %v618, %v617
      %v665 = vpack.c.b16 %v620, %v619
      %v666 = vpack.c.b16 %v622, %v621
      %v667 = vpack.c.b16 %v624, %v623
      %v668 = vpack.c.b16 %v626, %v625
      %v669 = vpack.c.b16 %v628, %v627
      %v670 = vpack.c.b16 %v630, %v629
      %v671 = vpack.c.b16 %v632, %v631
      %v672 = vpack.c.b16 %v634, %v633
      %v673 = vpack.c.b16 %v636, %v635
      %v674 = vpack.c.b16 %v638, %v637
      %v675 = vpack.c.b16 %v640, %v639
      %v676 = vpack.c.b16 %v642, %v641
      %v677 = vpack.c.b16 %v644, %v643
      %v678 = vpack.c.b16 %v646, %v645
      %vm679 = vcmask 261120
      %v681 = vsel %vm679, %v503, 0
      %v684 = vsel %vm679, %v504, 0
      %v687 = vsel %vm679, %v505, 0
      %v690 = vsel %vm679, %v506, 0
      %v693 = vsel %vm679, %v507, 0
      %v696 = vsel %vm679, %v508, 0
      %v699 = vsel %vm679, %v509, 0
      %v702 = vsel %vm679, %v510, 0
      %v705 = vsel %vm679, %v511, 0
      %v708 = vsel %vm679, %v512, 0
      %v711 = vsel %vm679, %v513, 0
      %v714 = vsel %vm679, %v514, 0
      %v717 = vsel %vm679, %v515, 0
      %v720 = vsel %vm679, %v516, 0
      %v723 = vsel %vm679, %v517, 0
      %v726 = vsel %vm679, %v518, 0
      %v729 = vsel %vm679, %v647, 0
      %v732 = vsel %vm679, %v648, 0
      %v735 = vsel %vm679, %v649, 0
      %v738 = vsel %vm679, %v650, 0
      %v741 = vsel %vm679, %v651, 0
      %v744 = vsel %vm679, %v652, 0
      %v747 = vsel %vm679, %v653, 0
      %v750 = vsel %vm679, %v654, 0
      %v753 = vsel %vm679, %v655, 0
      %v756 = vsel %vm679, %v656, 0
      %v759 = vsel %vm679, %v657, 0
      %v762 = vsel %vm679, %v658, 0
      %v765 = vsel %vm679, %v659, 0
      %v768 = vsel %vm679, %v660, 0
      %v771 = vsel %vm679, %v661, 0
      %v774 = vsel %vm679, %v662, 0
      %v777 = vsel %vm679, %v663, 0
      %v780 = vsel %vm679, %v664, 0
      %v783 = vsel %vm679, %v665, 0
      %v786 = vsel %vm679, %v666, 0
      %v789 = vsel %vm679, %v667, 0
      %v792 = vsel %vm679, %v668, 0
      %v795 = vsel %vm679, %v669, 0
      %v798 = vsel %vm679, %v670, 0
      %v801 = vsel %vm679, %v671, 0
      %v804 = vsel %vm679, %v672, 0
      %v807 = vsel %vm679, %v673, 0
      %v810 = vsel %vm679, %v674, 0
      %v813 = vsel %vm679, %v675, 0
      %v816 = vsel %vm679, %v676, 0
      %v819 = vsel %vm679, %v677, 0
      %v822 = vsel %vm679, %v678, 0
      %824 = vmatprep.subr.bf16.mxu0 0
      %825 = vmatpush1.bf16.xpose.msra.mxu0 %v729
      %826 = vmatprep.subr.bf16.mxu0 0
      %827 = vmatpush1.bf16.xpose.msra.mxu0 %v732
      %828 = vmatprep.subr.bf16.mxu0 0
      %829 = vmatpush1.bf16.xpose.msra.mxu0 %v735
      %830 = vmatprep.subr.bf16.mxu0 0
      %831 = vmatpush1.bf16.xpose.msra.mxu0 %v738
      %832 = vmatprep.subr.bf16.mxu0 0
      %833 = vmatpush1.bf16.xpose.msra.mxu0 %v741
      %834 = vmatprep.subr.bf16.mxu0 0
      %835 = vmatpush1.bf16.xpose.msra.mxu0 %v744
      %836 = vmatprep.subr.bf16.mxu0 0
      %837 = vmatpush1.bf16.xpose.msra.mxu0 %v747
      %838 = vmatprep.subr.bf16.mxu0 0
      %839 = vmatpush1.bf16.xpose.msra.mxu0 %v750
      %840 = vmatprep.subr.bf16.mxu0 0
      %841 = vmatpush1.bf16.xpose.msra.mxu0 %v753
      %842 = vmatprep.subr.bf16.mxu0 0
      %843 = vmatpush1.bf16.xpose.msra.mxu0 %v756
      %844 = vmatprep.subr.bf16.mxu0 0
      %845 = vmatpush1.bf16.xpose.msra.mxu0 %v759
      %846 = vmatprep.subr.bf16.mxu0 0
      %847 = vmatpush1.bf16.xpose.msra.mxu0 %v762
      %848 = vmatprep.subr.bf16.mxu0 0
      %849 = vmatpush1.bf16.xpose.msra.mxu0 %v765
      %850 = vmatprep.subr.bf16.mxu0 0
      %851 = vmatpush1.bf16.xpose.msra.mxu0 %v768
      %852 = vmatprep.subr.bf16.mxu0 0
      %853 = vmatpush1.bf16.xpose.msra.mxu0 %v771
      %854 = vmatprep.subr.bf16.mxu0 0
      %855 = vmatpush1.bf16.xpose.msra.mxu0 %v774
      %856 = vmatprep.mubr.bf16.mxu0 0
      %857 = vmatmul.mubr.bf16.gmra.mrb[0].mxu0 %v681
      %v858 = vpop.f32.mrb[0].mxu0
      %v859 = vadd.f32 0.0, %v858
      %v860 = vpop.f32.mrb[0].mxu0
      %v861 = vadd.f32 0.0, %v860
      %v862 = vpop.f32.mrb[0].mxu0
      %v863 = vadd.f32 0.0, %v862
      %v864 = vpop.f32.mrb[0].mxu0
      %v865 = vadd.f32 0.0, %v864
      %866 = vmatprep.mubr.bf16.mxu0 0
      %867 = vmatmul.mubr.bf16.gmra.mrb[0].mxu0 %v684
      %v868 = vpop.f32.mrb[0].mxu0
      %v869 = vadd.f32 0.0, %v868
      %v870 = vpop.f32.mrb[0].mxu0
      %v871 = vadd.f32 0.0, %v870
      %v872 = vpop.f32.mrb[0].mxu0
      %v873 = vadd.f32 0.0, %v872
      %v874 = vpop.f32.mrb[0].mxu0
      %v875 = vadd.f32 0.0, %v874
      %876 = vmatprep.mubr.bf16.mxu0 0
      %877 = vmatmul.mubr.bf16.gmra.mrb[0].mxu0 %v687
      %v878 = vpop.f32.mrb[0].mxu0
      %v879 = vadd.f32 0.0, %v878
      %v880 = vpop.f32.mrb[0].mxu0
      %v881 = vadd.f32 0.0, %v880
      %v882 = vpop.f32.mrb[0].mxu0
      %v883 = vadd.f32 0.0, %v882
      %v884 = vpop.f32.mrb[0].mxu0
      %v885 = vadd.f32 0.0, %v884
      %886 = vmatprep.mubr.bf16.mxu0 0
      %887 = vmatmul.mubr.bf16.gmra.mrb[0].mxu0 %v690
      %v888 = vpop.f32.mrb[0].mxu0
      %v889 = vadd.f32 0.0, %v888
      %v890 = vpop.f32.mrb[0].mxu0
      %v891 = vadd.f32 0.0, %v890
      %v892 = vpop.f32.mrb[0].mxu0
      %v893 = vadd.f32 0.0, %v892
      %v894 = vpop.f32.mrb[0].mxu0
      %v895 = vadd.f32 0.0, %v894
      %896 = vmatprep.mubr.bf16.mxu0 0
      %897 = vmatmul.mubr.bf16.gmra.mrb[0].mxu0 %v693
      %v898 = vpop.f32.mrb[0].mxu0
      %v899 = vadd.f32 0.0, %v898
      %v900 = vpop.f32.mrb[0].mxu0
      %v901 = vadd.f32 0.0, %v900
      %v902 = vpop.f32.mrb[0].mxu0
      %v903 = vadd.f32 0.0, %v902
      %v904 = vpop.f32.mrb[0].mxu0
      %v905 = vadd.f32 0.0, %v904
      %906 = vmatprep.mubr.bf16.mxu0 0
      %907 = vmatmul.mubr.bf16.gmra.mrb[0].mxu0 %v696
      %v908 = vpop.f32.mrb[0].mxu0
      %v909 = vadd.f32 0.0, %v908
      %v910 = vpop.f32.mrb[0].mxu0
      %v911 = vadd.f32 0.0, %v910
      %v912 = vpop.f32.mrb[0].mxu0
      %v913 = vadd.f32 0.0, %v912
      %v914 = vpop.f32.mrb[0].mxu0
      %v915 = vadd.f32 0.0, %v914
      %916 = vmatprep.mubr.bf16.mxu0 0
      %917 = vmatmul.mubr.bf16.gmra.mrb[0].mxu0 %v699
      %v918 = vpop.f32.mrb[0].mxu0
      %v919 = vadd.f32 0.0, %v918
      %v920 = vpop.f32.mrb[0].mxu0
      %v921 = vadd.f32 0.0, %v920
      %v922 = vpop.f32.mrb[0].mxu0
      %v923 = vadd.f32 0.0, %v922
      %v924 = vpop.f32.mrb[0].mxu0
      %v925 = vadd.f32 0.0, %v924
      %926 = vmatprep.mubr.bf16.mxu0 0
      %927 = vmatmul.mubr.bf16.gmra.mrb[0].mxu0 %v702
      %v928 = vpop.f32.mrb[0].mxu0
      %v929 = vadd.f32 0.0, %v928
      %v930 = vpop.f32.mrb[0].mxu0
      %v931 = vadd.f32 0.0, %v930
      %v932 = vpop.f32.mrb[0].mxu0
      %v933 = vadd.f32 0.0, %v932
      %v934 = vpop.f32.mrb[0].mxu0
      %v935 = vadd.f32 0.0, %v934
      %936 = vmatprep.mubr.bf16.mxu0 0
      %937 = vmatmul.mubr.bf16.gmra.mrb[0].mxu0 %v705
      %v938 = vpop.f32.mrb[0].mxu0
      %v939 = vadd.f32 0.0, %v938
      %v940 = vpop.f32.mrb[0].mxu0
      %v941 = vadd.f32 0.0, %v940
      %v942 = vpop.f32.mrb[0].mxu0
      %v943 = vadd.f32 0.0, %v942
      %v944 = vpop.f32.mrb[0].mxu0
      %v945 = vadd.f32 0.0, %v944
      %946 = vmatprep.mubr.bf16.mxu0 0
      %947 = vmatmul.mubr.bf16.gmra.mrb[0].mxu0 %v708
      %v948 = vpop.f32.mrb[0].mxu0
      %v949 = vadd.f32 0.0, %v948
      %v950 = vpop.f32.mrb[0].mxu0
      %v951 = vadd.f32 0.0, %v950
      %v952 = vpop.f32.mrb[0].mxu0
      %v953 = vadd.f32 0.0, %v952
      %v954 = vpop.f32.mrb[0].mxu0
      %v955 = vadd.f32 0.0, %v954
      %956 = vmatprep.mubr.bf16.mxu0 0
      %957 = vmatmul.mubr.bf16.gmra.mrb[0].mxu0 %v711
      %v958 = vpop.f32.mrb[0].mxu0
      %v959 = vadd.f32 0.0, %v958
      %v960 = vpop.f32.mrb[0].mxu0
      %v961 = vadd.f32 0.0, %v960
      %v962 = vpop.f32.mrb[0].mxu0
      %v963 = vadd.f32 0.0, %v962
      %v964 = vpop.f32.mrb[0].mxu0
      %v965 = vadd.f32 0.0, %v964
      %966 = vmatprep.mubr.bf16.mxu0 0
      %967 = vmatmul.mubr.bf16.gmra.mrb[0].mxu0 %v714
      %v968 = vpop.f32.mrb[0].mxu0
      %v969 = vadd.f32 0.0, %v968
      %v970 = vpop.f32.mrb[0].mxu0
      %v971 = vadd.f32 0.0, %v970
      %v972 = vpop.f32.mrb[0].mxu0
      %v973 = vadd.f32 0.0, %v972
      %v974 = vpop.f32.mrb[0].mxu0
      %v975 = vadd.f32 0.0, %v974
      %976 = vmatprep.mubr.bf16.mxu0 0
      %977 = vmatmul.mubr.bf16.gmra.mrb[0].mxu0 %v717
      %v978 = vpop.f32.mrb[0].mxu0
      %v979 = vadd.f32 0.0, %v978
      %v980 = vpop.f32.mrb[0].mxu0
      %v981 = vadd.f32 0.0, %v980
      %v982 = vpop.f32.mrb[0].mxu0
      %v983 = vadd.f32 0.0, %v982
      %v984 = vpop.f32.mrb[0].mxu0
      %v985 = vadd.f32 0.0, %v984
      %986 = vmatprep.mubr.bf16.mxu0 0
      %987 = vmatmul.mubr.bf16.gmra.mrb[0].mxu0 %v720
      %v988 = vpop.f32.mrb[0].mxu0
      %v989 = vadd.f32 0.0, %v988
      %v990 = vpop.f32.mrb[0].mxu0
      %v991 = vadd.f32 0.0, %v990
      %v992 = vpop.f32.mrb[0].mxu0
      %v993 = vadd.f32 0.0, %v992
      %v994 = vpop.f32.mrb[0].mxu0
      %v995 = vadd.f32 0.0, %v994
      %996 = vmatprep.mubr.bf16.mxu0 0
      %997 = vmatmul.mubr.bf16.gmra.mrb[0].mxu0 %v723
      %v998 = vpop.f32.mrb[0].mxu0
      %v999 = vadd.f32 0.0, %v998
      %v1000 = vpop.f32.mrb[0].mxu0
      %v1001 = vadd.f32 0.0, %v1000
      %v1002 = vpop.f32.mrb[0].mxu0
      %v1003 = vadd.f32 0.0, %v1002
      %v1004 = vpop.f32.mrb[0].mxu0
      %v1005 = vadd.f32 0.0, %v1004
      %1006 = vmatprep.mubr.bf16.mxu0 0
      %1007 = vmatmul.mubr.bf16.gmra.mrb[0].mxu0 %v726
      %v1008 = vpop.f32.mrb[0].mxu0
      %v1009 = vadd.f32 0.0, %v1008
      %v1010 = vpop.f32.mrb[0].mxu0
      %v1011 = vadd.f32 0.0, %v1010
      %v1012 = vpop.f32.mrb[0].mxu0
      %v1013 = vadd.f32 0.0, %v1012
      %v1014 = vpop.f32.mrb[0].mxu0
      %v1015 = vadd.f32 0.0, %v1014
      %1016 = vdwg.mxu0
      %1017 = vmatprep.subr.bf16.mxu0 0
      %1018 = vmatpush1.bf16.xpose.msra.mxu0 %v777
      %1019 = vmatprep.subr.bf16.mxu0 0
      %1020 = vmatpush1.bf16.xpose.msra.mxu0 %v780
      %1021 = vmatprep.subr.bf16.mxu0 0
      %1022 = vmatpush1.bf16.xpose.msra.mxu0 %v783
      %1023 = vmatprep.subr.bf16.mxu0 0
      %1024 = vmatpush1.bf16.xpose.msra.mxu0 %v786
      %1025 = vmatprep.subr.bf16.mxu0 0
      %1026 = vmatpush1.bf16.xpose.msra.mxu0 %v789
      %1027 = vmatprep.subr.bf16.mxu0 0
      %1028 = vmatpush1.bf16.xpose.msra.mxu0 %v792
      %1029 = vmatprep.subr.bf16.mxu0 0
      %1030 = vmatpush1.bf16.xpose.msra.mxu0 %v795
      %1031 = vmatprep.subr.bf16.mxu0 0
      %1032 = vmatpush1.bf16.xpose.msra.mxu0 %v798
      %1033 = vmatprep.subr.bf16.mxu0 0
      %1034 = vmatpush1.bf16.xpose.msra.mxu0 %v801
      %1035 = vmatprep.subr.bf16.mxu0 0
      %1036 = vmatpush1.bf16.xpose.msra.mxu0 %v804
      %1037 = vmatprep.subr.bf16.mxu0 0
      %1038 = vmatpush1.bf16.xpose.msra.mxu0 %v807
      %1039 = vmatprep.subr.bf16.mxu0 0
      %1040 = vmatpush1.bf16.xpose.msra.mxu0 %v810
      %1041 = vmatprep.subr.bf16.mxu0 0
      %1042 = vmatpush1.bf16.xpose.msra.mxu0 %v813
      %1043 = vmatprep.subr.bf16.mxu0 0
      %1044 = vmatpush1.bf16.xpose.msra.mxu0 %v816
      %1045 = vmatprep.subr.bf16.mxu0 0
      %1046 = vmatpush1.bf16.xpose.msra.mxu0 %v819
      %1047 = vmatprep.subr.bf16.mxu0 0
      %1048 = vmatpush1.bf16.xpose.msra.mxu0 %v822
      %1049 = vmatprep.mubr.bf16.mxu0 0
      %1050 = vmatmul.mubr.bf16.gmra.mrb[0].mxu0 %v681
      %v1051 = vpop.f32.mrb[0].mxu0
      %v1052 = vadd.f32 0.0, %v1051
      %v1053 = vpop.f32.mrb[0].mxu0
      %v1054 = vadd.f32 0.0, %v1053
      %v1055 = vpop.f32.mrb[0].mxu0
      %v1056 = vadd.f32 0.0, %v1055
      %v1057 = vpop.f32.mrb[0].mxu0
      %v1058 = vadd.f32 0.0, %v1057
      %1059 = vmatprep.mubr.bf16.mxu0 0
      %1060 = vmatmul.mubr.bf16.gmra.mrb[0].mxu0 %v684
      %v1061 = vpop.f32.mrb[0].mxu0
      %v1062 = vadd.f32 0.0, %v1061
      %v1063 = vpop.f32.mrb[0].mxu0
      %v1064 = vadd.f32 0.0, %v1063
      %v1065 = vpop.f32.mrb[0].mxu0
      %v1066 = vadd.f32 0.0, %v1065
      %v1067 = vpop.f32.mrb[0].mxu0
      %v1068 = vadd.f32 0.0, %v1067
      %1069 = vmatprep.mubr.bf16.mxu0 0
      %1070 = vmatmul.mubr.bf16.gmra.mrb[0].mxu0 %v687
      %v1071 = vpop.f32.mrb[0].mxu0
      %v1072 = vadd.f32 0.0, %v1071
      %v1073 = vpop.f32.mrb[0].mxu0
      %v1074 = vadd.f32 0.0, %v1073
      %v1075 = vpop.f32.mrb[0].mxu0
      %v1076 = vadd.f32 0.0, %v1075
      %v1077 = vpop.f32.mrb[0].mxu0
      %v1078 = vadd.f32 0.0, %v1077
      %1079 = vmatprep.mubr.bf16.mxu0 0
      %1080 = vmatmul.mubr.bf16.gmra.mrb[0].mxu0 %v690
      %v1081 = vpop.f32.mrb[0].mxu0
      %v1082 = vadd.f32 0.0, %v1081
      %v1083 = vpop.f32.mrb[0].mxu0
      %v1084 = vadd.f32 0.0, %v1083
      %v1085 = vpop.f32.mrb[0].mxu0
      %v1086 = vadd.f32 0.0, %v1085
      %v1087 = vpop.f32.mrb[0].mxu0
      %v1088 = vadd.f32 0.0, %v1087
      %1089 = vmatprep.mubr.bf16.mxu0 0
      %1090 = vmatmul.mubr.bf16.gmra.mrb[0].mxu0 %v693
      %v1091 = vpop.f32.mrb[0].mxu0
      %v1092 = vadd.f32 0.0, %v1091
      %v1093 = vpop.f32.mrb[0].mxu0
      %v1094 = vadd.f32 0.0, %v1093
      %v1095 = vpop.f32.mrb[0].mxu0
      %v1096 = vadd.f32 0.0, %v1095
      %v1097 = vpop.f32.mrb[0].mxu0
      %v1098 = vadd.f32 0.0, %v1097
      %1099 = vmatprep.mubr.bf16.mxu0 0
      %1100 = vmatmul.mubr.bf16.gmra.mrb[0].mxu0 %v696
      %v1101 = vpop.f32.mrb[0].mxu0
      %v1102 = vadd.f32 0.0, %v1101
      %v1103 = vpop.f32.mrb[0].mxu0
      %v1104 = vadd.f32 0.0, %v1103
      %v1105 = vpop.f32.mrb[0].mxu0
      %v1106 = vadd.f32 0.0, %v1105
      %v1107 = vpop.f32.mrb[0].mxu0
      %v1108 = vadd.f32 0.0, %v1107
      %1109 = vmatprep.mubr.bf16.mxu0 0
      %1110 = vmatmul.mubr.bf16.gmra.mrb[0].mxu0 %v699
      %v1111 = vpop.f32.mrb[0].mxu0
      %v1112 = vadd.f32 0.0, %v1111
      %v1113 = vpop.f32.mrb[0].mxu0
      %v1114 = vadd.f32 0.0, %v1113
      %v1115 = vpop.f32.mrb[0].mxu0
      %v1116 = vadd.f32 0.0, %v1115
      %v1117 = vpop.f32.mrb[0].mxu0
      %v1118 = vadd.f32 0.0, %v1117
      %1119 = vmatprep.mubr.bf16.mxu0 0
      %1120 = vmatmul.mubr.bf16.gmra.mrb[0].mxu0 %v702
      %v1121 = vpop.f32.mrb[0].mxu0
      %v1122 = vadd.f32 0.0, %v1121
      %v1123 = vpop.f32.mrb[0].mxu0
      %v1124 = vadd.f32 0.0, %v1123
      %v1125 = vpop.f32.mrb[0].mxu0
      %v1126 = vadd.f32 0.0, %v1125
      %v1127 = vpop.f32.mrb[0].mxu0
      %v1128 = vadd.f32 0.0, %v1127
      %1129 = vmatprep.mubr.bf16.mxu0 0
      %1130 = vmatmul.mubr.bf16.gmra.mrb[0].mxu0 %v705
      %v1131 = vpop.f32.mrb[0].mxu0
      %v1132 = vadd.f32 0.0, %v1131
      %v1133 = vpop.f32.mrb[0].mxu0
      %v1134 = vadd.f32 0.0, %v1133
      %v1135 = vpop.f32.mrb[0].mxu0
      %v1136 = vadd.f32 0.0, %v1135
      %v1137 = vpop.f32.mrb[0].mxu0
      %v1138 = vadd.f32 0.0, %v1137
      %1139 = vmatprep.mubr.bf16.mxu0 0
      %1140 = vmatmul.mubr.bf16.gmra.mrb[0].mxu0 %v708
      %v1141 = vpop.f32.mrb[0].mxu0
      %v1142 = vadd.f32 0.0, %v1141
      %v1143 = vpop.f32.mrb[0].mxu0
      %v1144 = vadd.f32 0.0, %v1143
      %v1145 = vpop.f32.mrb[0].mxu0
      %v1146 = vadd.f32 0.0, %v1145
      %v1147 = vpop.f32.mrb[0].mxu0
      %v1148 = vadd.f32 0.0, %v1147
      %1149 = vmatprep.mubr.bf16.mxu0 0
      %1150 = vmatmul.mubr.bf16.gmra.mrb[0].mxu0 %v711
      %v1151 = vpop.f32.mrb[0].mxu0
      %v1152 = vadd.f32 0.0, %v1151
      %v1153 = vpop.f32.mrb[0].mxu0
      %v1154 = vadd.f32 0.0, %v1153
      %v1155 = vpop.f32.mrb[0].mxu0
      %v1156 = vadd.f32 0.0, %v1155
      %v1157 = vpop.f32.mrb[0].mxu0
      %v1158 = vadd.f32 0.0, %v1157
      %1159 = vmatprep.mubr.bf16.mxu0 0
      %1160 = vmatmul.mubr.bf16.gmra.mrb[0].mxu0 %v714
      %v1161 = vpop.f32.mrb[0].mxu0
      %v1162 = vadd.f32 0.0, %v1161
      %v1163 = vpop.f32.mrb[0].mxu0
      %v1164 = vadd.f32 0.0, %v1163
      %v1165 = vpop.f32.mrb[0].mxu0
      %v1166 = vadd.f32 0.0, %v1165
      %v1167 = vpop.f32.mrb[0].mxu0
      %v1168 = vadd.f32 0.0, %v1167
      %1169 = vmatprep.mubr.bf16.mxu0 0
      %1170 = vmatmul.mubr.bf16.gmra.mrb[0].mxu0 %v717
      %v1171 = vpop.f32.mrb[0].mxu0
      %v1172 = vadd.f32 0.0, %v1171
      %v1173 = vpop.f32.mrb[0].mxu0
      %v1174 = vadd.f32 0.0, %v1173
      %v1175 = vpop.f32.mrb[0].mxu0
      %v1176 = vadd.f32 0.0, %v1175
      %v1177 = vpop.f32.mrb[0].mxu0
      %v1178 = vadd.f32 0.0, %v1177
      %1179 = vmatprep.mubr.bf16.mxu0 0
      %1180 = vmatmul.mubr.bf16.gmra.mrb[0].mxu0 %v720
      %v1181 = vpop.f32.mrb[0].mxu0
      %v1182 = vadd.f32 0.0, %v1181
      %v1183 = vpop.f32.mrb[0].mxu0
      %v1184 = vadd.f32 0.0, %v1183
      %v1185 = vpop.f32.mrb[0].mxu0
      %v1186 = vadd.f32 0.0, %v1185
      %v1187 = vpop.f32.mrb[0].mxu0
      %v1188 = vadd.f32 0.0, %v1187
      %1189 = vmatprep.mubr.bf16.mxu0 0
      %1190 = vmatmul.mubr.bf16.gmra.mrb[0].mxu0 %v723
      %v1191 = vpop.f32.mrb[0].mxu0
      %v1192 = vadd.f32 0.0, %v1191
      %v1193 = vpop.f32.mrb[0].mxu0
      %v1194 = vadd.f32 0.0, %v1193
      %v1195 = vpop.f32.mrb[0].mxu0
      %v1196 = vadd.f32 0.0, %v1195
      %v1197 = vpop.f32.mrb[0].mxu0
      %v1198 = vadd.f32 0.0, %v1197
      %1199 = vmatprep.mubr.bf16.mxu0 0
      %1200 = vmatmul.mubr.bf16.gmra.mrb[0].mxu0 %v726
      %v1201 = vpop.f32.mrb[0].mxu0
      %v1202 = vadd.f32 0.0, %v1201
      %v1203 = vpop.f32.mrb[0].mxu0
      %v1204 = vadd.f32 0.0, %v1203
      %v1205 = vpop.f32.mrb[0].mxu0
      %v1206 = vadd.f32 0.0, %v1205
      %v1207 = vpop.f32.mrb[0].mxu0
      %v1208 = vadd.f32 0.0, %v1207
      %1209 = vdwg.mxu0
      %v1210 = vand.u32 2147483647, %v859
      %v1211 = vand.u32 2147483647, %v861
      %v1212 = vand.u32 2147483647, %v1052
      %v1213 = vand.u32 2147483647, %v1054
      %v1214 = vand.u32 2147483647, %v863
      %v1215 = vand.u32 2147483647, %v865
      %v1216 = vand.u32 2147483647, %v1056
      %v1217 = vand.u32 2147483647, %v1058
      %v1218 = vand.u32 2147483647, %v869
      %v1219 = vand.u32 2147483647, %v871
      %v1220 = vand.u32 2147483647, %v1062
      %v1221 = vand.u32 2147483647, %v1064
      %v1222 = vand.u32 2147483647, %v873
      %v1223 = vand.u32 2147483647, %v875
      %v1224 = vand.u32 2147483647, %v1066
      %v1225 = vand.u32 2147483647, %v1068
      %v1226 = vand.u32 2147483647, %v879
      %v1227 = vand.u32 2147483647, %v881
      %v1228 = vand.u32 2147483647, %v1072
      %v1229 = vand.u32 2147483647, %v1074
      %v1230 = vand.u32 2147483647, %v883
      %v1231 = vand.u32 2147483647, %v885
      %v1232 = vand.u32 2147483647, %v1076
      %v1233 = vand.u32 2147483647, %v1078
      %v1234 = vand.u32 2147483647, %v889
      %v1235 = vand.u32 2147483647, %v891
      %v1236 = vand.u32 2147483647, %v1082
      %v1237 = vand.u32 2147483647, %v1084
      %v1238 = vand.u32 2147483647, %v893
      %v1239 = vand.u32 2147483647, %v895
      %v1240 = vand.u32 2147483647, %v1086
      %v1241 = vand.u32 2147483647, %v1088
      %v1242 = vand.u32 2147483647, %v899
      %v1243 = vand.u32 2147483647, %v901
      %v1244 = vand.u32 2147483647, %v1092
      %v1245 = vand.u32 2147483647, %v1094
      %v1246 = vand.u32 2147483647, %v903
      %v1247 = vand.u32 2147483647, %v905
      %v1248 = vand.u32 2147483647, %v1096
      %v1249 = vand.u32 2147483647, %v1098
      %v1250 = vand.u32 2147483647, %v909
      %v1251 = vand.u32 2147483647, %v911
      %v1252 = vand.u32 2147483647, %v1102
      %v1253 = vand.u32 2147483647, %v1104
      %v1254 = vand.u32 2147483647, %v913
      %v1255 = vand.u32 2147483647, %v915
      %v1256 = vand.u32 2147483647, %v1106
      %v1257 = vand.u32 2147483647, %v1108
      %v1258 = vand.u32 2147483647, %v919
      %v1259 = vand.u32 2147483647, %v921
      %v1260 = vand.u32 2147483647, %v1112
      %v1261 = vand.u32 2147483647, %v1114
      %v1262 = vand.u32 2147483647, %v923
      %v1263 = vand.u32 2147483647, %v925
      %v1264 = vand.u32 2147483647, %v1116
      %v1265 = vand.u32 2147483647, %v1118
      %v1266 = vand.u32 2147483647, %v929
      %v1267 = vand.u32 2147483647, %v931
      %v1268 = vand.u32 2147483647, %v1122
      %v1269 = vand.u32 2147483647, %v1124
      %v1270 = vand.u32 2147483647, %v933
      %v1271 = vand.u32 2147483647, %v935
      %v1272 = vand.u32 2147483647, %v1126
      %v1273 = vand.u32 2147483647, %v1128
      %v1274 = vand.u32 2147483647, %v939
      %v1275 = vand.u32 2147483647, %v941
      %v1276 = vand.u32 2147483647, %v1132
      %v1277 = vand.u32 2147483647, %v1134
      %v1278 = vand.u32 2147483647, %v943
      %v1279 = vand.u32 2147483647, %v945
      %v1280 = vand.u32 2147483647, %v1136
      %v1281 = vand.u32 2147483647, %v1138
      %v1282 = vand.u32 2147483647, %v949
      %v1283 = vand.u32 2147483647, %v951
      %v1284 = vand.u32 2147483647, %v1142
      %v1285 = vand.u32 2147483647, %v1144
      %v1286 = vand.u32 2147483647, %v953
      %v1287 = vand.u32 2147483647, %v955
      %v1288 = vand.u32 2147483647, %v1146
      %v1289 = vand.u32 2147483647, %v1148
      %v1290 = vand.u32 2147483647, %v959
      %v1291 = vand.u32 2147483647, %v961
      %v1292 = vand.u32 2147483647, %v1152
      %v1293 = vand.u32 2147483647, %v1154
      %v1294 = vand.u32 2147483647, %v963
      %v1295 = vand.u32 2147483647, %v965
      %v1296 = vand.u32 2147483647, %v1156
      %v1297 = vand.u32 2147483647, %v1158
      %v1298 = vand.u32 2147483647, %v969
      %v1299 = vand.u32 2147483647, %v971
      %v1300 = vand.u32 2147483647, %v1162
      %v1301 = vand.u32 2147483647, %v1164
      %v1302 = vand.u32 2147483647, %v973
      %v1303 = vand.u32 2147483647, %v975
      %v1304 = vand.u32 2147483647, %v1166
      %v1305 = vand.u32 2147483647, %v1168
      %v1306 = vand.u32 2147483647, %v979
      %v1307 = vand.u32 2147483647, %v981
      %v1308 = vand.u32 2147483647, %v1172
      %v1309 = vand.u32 2147483647, %v1174
      %v1310 = vand.u32 2147483647, %v983
      %v1311 = vand.u32 2147483647, %v985
      %v1312 = vand.u32 2147483647, %v1176
      %v1313 = vand.u32 2147483647, %v1178
      %v1314 = vand.u32 2147483647, %v989
      %v1315 = vand.u32 2147483647, %v991
      %v1316 = vand.u32 2147483647, %v1182
      %v1317 = vand.u32 2147483647, %v1184
      %v1318 = vand.u32 2147483647, %v993
      %v1319 = vand.u32 2147483647, %v995
      %v1320 = vand.u32 2147483647, %v1186
      %v1321 = vand.u32 2147483647, %v1188
      %v1322 = vand.u32 2147483647, %v999
      %v1323 = vand.u32 2147483647, %v1001
      %v1324 = vand.u32 2147483647, %v1192
      %v1325 = vand.u32 2147483647, %v1194
      %v1326 = vand.u32 2147483647, %v1003
      %v1327 = vand.u32 2147483647, %v1005
      %v1328 = vand.u32 2147483647, %v1196
      %v1329 = vand.u32 2147483647, %v1198
      %v1330 = vand.u32 2147483647, %v1009
      %v1331 = vand.u32 2147483647, %v1011
      %v1332 = vand.u32 2147483647, %v1202
      %v1333 = vand.u32 2147483647, %v1204
      %v1334 = vand.u32 2147483647, %v1013
      %v1335 = vand.u32 2147483647, %v1015
      %v1336 = vand.u32 2147483647, %v1206
      %v1337 = vand.u32 2147483647, %v1208
      %v1338 = vmul.f32 %v1210, -0.01
      %v1339 = vmul.f32 %v1211, -0.01
      %v1340 = vmul.f32 %v1212, -0.01
      %v1341 = vmul.f32 %v1213, -0.01
      %v1342 = vmul.f32 %v1214, -0.01
      %v1343 = vmul.f32 %v1215, -0.01
      %v1344 = vmul.f32 %v1216, -0.01
      %v1345 = vmul.f32 %v1217, -0.01
      %v1346 = vmul.f32 %v1218, -0.01
      %v1347 = vmul.f32 %v1219, -0.01
      %v1348 = vmul.f32 %v1220, -0.01
      %v1349 = vmul.f32 %v1221, -0.01
      %v1350 = vmul.f32 %v1222, -0.01
      %v1351 = vmul.f32 %v1223, -0.01
      %v1352 = vmul.f32 %v1224, -0.01
      %v1353 = vmul.f32 %v1225, -0.01
      %v1354 = vmul.f32 %v1226, -0.01
      %v1355 = vmul.f32 %v1227, -0.01
      %v1356 = vmul.f32 %v1228, -0.01
      %v1357 = vmul.f32 %v1229, -0.01
      %v1358 = vmul.f32 %v1230, -0.01
      %v1359 = vmul.f32 %v1231, -0.01
      %v1360 = vmul.f32 %v1232, -0.01
      %v1361 = vmul.f32 %v1233, -0.01
      %v1362 = vmul.f32 %v1234, -0.01
      %v1363 = vmul.f32 %v1235, -0.01
      %v1364 = vmul.f32 %v1236, -0.01
      %v1365 = vmul.f32 %v1237, -0.01
      %v1366 = vmul.f32 %v1238, -0.01
      %v1367 = vmul.f32 %v1239, -0.01
      %v1368 = vmul.f32 %v1240, -0.01
      %v1369 = vmul.f32 %v1241, -0.01
      %v1370 = vmul.f32 %v1242, -0.01
      %v1371 = vmul.f32 %v1243, -0.01
      %v1372 = vmul.f32 %v1244, -0.01
      %v1373 = vmul.f32 %v1245, -0.01
      %v1374 = vmul.f32 %v1246, -0.01
      %v1375 = vmul.f32 %v1247, -0.01
      %v1376 = vmul.f32 %v1248, -0.01
      %v1377 = vmul.f32 %v1249, -0.01
      %v1378 = vmul.f32 %v1250, -0.01
      %v1379 = vmul.f32 %v1251, -0.01
      %v1380 = vmul.f32 %v1252, -0.01
      %v1381 = vmul.f32 %v1253, -0.01
      %v1382 = vmul.f32 %v1254, -0.01
      %v1383 = vmul.f32 %v1255, -0.01
      %v1384 = vmul.f32 %v1256, -0.01
      %v1385 = vmul.f32 %v1257, -0.01
      %v1386 = vmul.f32 %v1258, -0.01
      %v1387 = vmul.f32 %v1259, -0.01
      %v1388 = vmul.f32 %v1260, -0.01
      %v1389 = vmul.f32 %v1261, -0.01
      %v1390 = vmul.f32 %v1262, -0.01
      %v1391 = vmul.f32 %v1263, -0.01
      %v1392 = vmul.f32 %v1264, -0.01
      %v1393 = vmul.f32 %v1265, -0.01
      %v1394 = vmul.f32 %v1266, -0.01
      %v1395 = vmul.f32 %v1267, -0.01
      %v1396 = vmul.f32 %v1268, -0.01
      %v1397 = vmul.f32 %v1269, -0.01
      %v1398 = vmul.f32 %v1270, -0.01
      %v1399 = vmul.f32 %v1271, -0.01
      %v1400 = vmul.f32 %v1272, -0.01
      %v1401 = vmul.f32 %v1273, -0.01
      %v1402 = vmul.f32 %v1274, -0.01
      %v1403 = vmul.f32 %v1275, -0.01
      %v1404 = vmul.f32 %v1276, -0.01
      %v1405 = vmul.f32 %v1277, -0.01
      %v1406 = vmul.f32 %v1278, -0.01
      %v1407 = vmul.f32 %v1279, -0.01
      %v1408 = vmul.f32 %v1280, -0.01
      %v1409 = vmul.f32 %v1281, -0.01
      %v1410 = vmul.f32 %v1282, -0.01
      %v1411 = vmul.f32 %v1283, -0.01
      %v1412 = vmul.f32 %v1284, -0.01
      %v1413 = vmul.f32 %v1285, -0.01
      %v1414 = vmul.f32 %v1286, -0.01
      %v1415 = vmul.f32 %v1287, -0.01
      %v1416 = vmul.f32 %v1288, -0.01
      %v1417 = vmul.f32 %v1289, -0.01
      %v1418 = vmul.f32 %v1290, -0.01
      %v1419 = vmul.f32 %v1291, -0.01
      %v1420 = vmul.f32 %v1292, -0.01
      %v1421 = vmul.f32 %v1293, -0.01
      %v1422 = vmul.f32 %v1294, -0.01
      %v1423 = vmul.f32 %v1295, -0.01
      %v1424 = vmul.f32 %v1296, -0.01
      %v1425 = vmul.f32 %v1297, -0.01
      %v1426 = vmul.f32 %v1298, -0.01
      %v1427 = vmul.f32 %v1299, -0.01
      %v1428 = vmul.f32 %v1300, -0.01
      %v1429 = vmul.f32 %v1301, -0.01
      %v1430 = vmul.f32 %v1302, -0.01
      %v1431 = vmul.f32 %v1303, -0.01
      %v1432 = vmul.f32 %v1304, -0.01
      %v1433 = vmul.f32 %v1305, -0.01
      %v1434 = vmul.f32 %v1306, -0.01
      %v1435 = vmul.f32 %v1307, -0.01
      %v1436 = vmul.f32 %v1308, -0.01
      %v1437 = vmul.f32 %v1309, -0.01
      %v1438 = vmul.f32 %v1310, -0.01
      %v1439 = vmul.f32 %v1311, -0.01
      %v1440 = vmul.f32 %v1312, -0.01
      %v1441 = vmul.f32 %v1313, -0.01
      %v1442 = vmul.f32 %v1314, -0.01
      %v1443 = vmul.f32 %v1315, -0.01
      %v1444 = vmul.f32 %v1316, -0.01
      %v1445 = vmul.f32 %v1317, -0.01
      %v1446 = vmul.f32 %v1318, -0.01
      %v1447 = vmul.f32 %v1319, -0.01
      %v1448 = vmul.f32 %v1320, -0.01
      %v1449 = vmul.f32 %v1321, -0.01
      %v1450 = vmul.f32 %v1322, -0.01
      %v1451 = vmul.f32 %v1323, -0.01
      %v1452 = vmul.f32 %v1324, -0.01
      %v1453 = vmul.f32 %v1325, -0.01
      %v1454 = vmul.f32 %v1326, -0.01
      %v1455 = vmul.f32 %v1327, -0.01
      %v1456 = vmul.f32 %v1328, -0.01
      %v1457 = vmul.f32 %v1329, -0.01
      %v1458 = vmul.f32 %v1330, -0.01
      %v1459 = vmul.f32 %v1331, -0.01
      %v1460 = vmul.f32 %v1332, -0.01
      %v1461 = vmul.f32 %v1333, -0.01
      %v1462 = vmul.f32 %v1334, -0.01
      %v1463 = vmul.f32 %v1335, -0.01
      %v1464 = vmul.f32 %v1336, -0.01
      %v1465 = vmul.f32 %v1337, -0.01
      %v1466 = vmul.f32 %v1338, 1.442695
      %v1467 = vpow.pop %v1466
      %v1468 = vmul.f32 %v1339, 1.442695
      %v1469 = vpow.pop %v1468
      %v1470 = vmul.f32 %v1340, 1.442695
      %v1471 = vpow.pop %v1470
      %v1472 = vmul.f32 %v1341, 1.442695
      %v1473 = vpow.pop %v1472
      %v1474 = vmul.f32 %v1342, 1.442695
      %v1475 = vpow.pop %v1474
      %v1476 = vmul.f32 %v1343, 1.442695
      %v1477 = vpow.pop %v1476
      %v1478 = vmul.f32 %v1344, 1.442695
      %v1479 = vpow.pop %v1478
      %v1480 = vmul.f32 %v1345, 1.442695
      %v1481 = vpow.pop %v1480
      %v1482 = vmul.f32 %v1346, 1.442695
      %v1483 = vpow.pop %v1482
      %v1484 = vmul.f32 %v1347, 1.442695
      %v1485 = vpow.pop %v1484
      %v1486 = vmul.f32 %v1348, 1.442695
      %v1487 = vpow.pop %v1486
      %v1488 = vmul.f32 %v1349, 1.442695
      %v1489 = vpow.pop %v1488
      %v1490 = vmul.f32 %v1350, 1.442695
      %v1491 = vpow.pop %v1490
      %v1492 = vmul.f32 %v1351, 1.442695
      %v1493 = vpow.pop %v1492
      %v1494 = vmul.f32 %v1352, 1.442695
      %v1495 = vpow.pop %v1494
      %v1496 = vmul.f32 %v1353, 1.442695
      %v1497 = vpow.pop %v1496
      %v1498 = vmul.f32 %v1354, 1.442695
      %v1499 = vpow.pop %v1498
      %v1500 = vmul.f32 %v1355, 1.442695
      %v1501 = vpow.pop %v1500
      %v1502 = vmul.f32 %v1356, 1.442695
      %v1503 = vpow.pop %v1502
      %v1504 = vmul.f32 %v1357, 1.442695
      %v1505 = vpow.pop %v1504
      %v1506 = vmul.f32 %v1358, 1.442695
      %v1507 = vpow.pop %v1506
      %v1508 = vmul.f32 %v1359, 1.442695
      %v1509 = vpow.pop %v1508
      %v1510 = vmul.f32 %v1360, 1.442695
      %v1511 = vpow.pop %v1510
      %v1512 = vmul.f32 %v1361, 1.442695
      %v1513 = vpow.pop %v1512
      %v1514 = vmul.f32 %v1362, 1.442695
      %v1515 = vpow.pop %v1514
      %v1516 = vmul.f32 %v1363, 1.442695
      %v1517 = vpow.pop %v1516
      %v1518 = vmul.f32 %v1364, 1.442695
      %v1519 = vpow.pop %v1518
      %v1520 = vmul.f32 %v1365, 1.442695
      %v1521 = vpow.pop %v1520
      %v1522 = vmul.f32 %v1366, 1.442695
      %v1523 = vpow.pop %v1522
      %v1524 = vmul.f32 %v1367, 1.442695
      %v1525 = vpow.pop %v1524
      %v1526 = vmul.f32 %v1368, 1.442695
      %v1527 = vpow.pop %v1526
      %v1528 = vmul.f32 %v1369, 1.442695
      %v1529 = vpow.pop %v1528
      %v1530 = vmul.f32 %v1370, 1.442695
      %v1531 = vpow.pop %v1530
      %v1532 = vmul.f32 %v1371, 1.442695
      %v1533 = vpow.pop %v1532
      %v1534 = vmul.f32 %v1372, 1.442695
      %v1535 = vpow.pop %v1534
      %v1536 = vmul.f32 %v1373, 1.442695
      %v1537 = vpow.pop %v1536
      %v1538 = vmul.f32 %v1374, 1.442695
      %v1539 = vpow.pop %v1538
      %v1540 = vmul.f32 %v1375, 1.442695
      %v1541 = vpow.pop %v1540
      %v1542 = vmul.f32 %v1376, 1.442695
      %v1543 = vpow.pop %v1542
      %v1544 = vmul.f32 %v1377, 1.442695
      %v1545 = vpow.pop %v1544
      %v1546 = vmul.f32 %v1378, 1.442695
      %v1547 = vpow.pop %v1546
      %v1548 = vmul.f32 %v1379, 1.442695
      %v1549 = vpow.pop %v1548
      %v1550 = vmul.f32 %v1380, 1.442695
      %v1551 = vpow.pop %v1550
      %v1552 = vmul.f32 %v1381, 1.442695
      %v1553 = vpow.pop %v1552
      %v1554 = vmul.f32 %v1382, 1.442695
      %v1555 = vpow.pop %v1554
      %v1556 = vmul.f32 %v1383, 1.442695
      %v1557 = vpow.pop %v1556
      %v1558 = vmul.f32 %v1384, 1.442695
      %v1559 = vpow.pop %v1558
      %v1560 = vmul.f32 %v1385, 1.442695
      %v1561 = vpow.pop %v1560
      %v1562 = vmul.f32 %v1386, 1.442695
      %v1563 = vpow.pop %v1562
      %v1564 = vmul.f32 %v1387, 1.442695
      %v1565 = vpow.pop %v1564
      %v1566 = vmul.f32 %v1388, 1.442695
      %v1567 = vpow.pop %v1566
      %v1568 = vmul.f32 %v1389, 1.442695
      %v1569 = vpow.pop %v1568
      %v1570 = vmul.f32 %v1390, 1.442695
      %v1571 = vpow.pop %v1570
      %v1572 = vmul.f32 %v1391, 1.442695
      %v1573 = vpow.pop %v1572
      %v1574 = vmul.f32 %v1392, 1.442695
      %v1575 = vpow.pop %v1574
      %v1576 = vmul.f32 %v1393, 1.442695
      %v1577 = vpow.pop %v1576
      %v1578 = vmul.f32 %v1394, 1.442695
      %v1579 = vpow.pop %v1578
      %v1580 = vmul.f32 %v1395, 1.442695
      %v1581 = vpow.pop %v1580
      %v1582 = vmul.f32 %v1396, 1.442695
      %v1583 = vpow.pop %v1582
      %v1584 = vmul.f32 %v1397, 1.442695
      %v1585 = vpow.pop %v1584
      %v1586 = vmul.f32 %v1398, 1.442695
      %v1587 = vpow.pop %v1586
      %v1588 = vmul.f32 %v1399, 1.442695
      %v1589 = vpow.pop %v1588
      %v1590 = vmul.f32 %v1400, 1.442695
      %v1591 = vpow.pop %v1590
      %v1592 = vmul.f32 %v1401, 1.442695
      %v1593 = vpow.pop %v1592
      %v1594 = vmul.f32 %v1402, 1.442695
      %v1595 = vpow.pop %v1594
      %v1596 = vmul.f32 %v1403, 1.442695
      %v1597 = vpow.pop %v1596
      %v1598 = vmul.f32 %v1404, 1.442695
      %v1599 = vpow.pop %v1598
      %v1600 = vmul.f32 %v1405, 1.442695
      %v1601 = vpow.pop %v1600
      %v1602 = vmul.f32 %v1406, 1.442695
      %v1603 = vpow.pop %v1602
      %v1604 = vmul.f32 %v1407, 1.442695
      %v1605 = vpow.pop %v1604
      %v1606 = vmul.f32 %v1408, 1.442695
      %v1607 = vpow.pop %v1606
      %v1608 = vmul.f32 %v1409, 1.442695
      %v1609 = vpow.pop %v1608
      %v1610 = vmul.f32 %v1410, 1.442695
      %v1611 = vpow.pop %v1610
      %v1612 = vmul.f32 %v1411, 1.442695
      %v1613 = vpow.pop %v1612
      %v1614 = vmul.f32 %v1412, 1.442695
      %v1615 = vpow.pop %v1614
      %v1616 = vmul.f32 %v1413, 1.442695
      %v1617 = vpow.pop %v1616
      %v1618 = vmul.f32 %v1414, 1.442695
      %v1619 = vpow.pop %v1618
      %v1620 = vmul.f32 %v1415, 1.442695
      %v1621 = vpow.pop %v1620
      %v1622 = vmul.f32 %v1416, 1.442695
      %v1623 = vpow.pop %v1622
      %v1624 = vmul.f32 %v1417, 1.442695
      %v1625 = vpow.pop %v1624
      %v1626 = vmul.f32 %v1418, 1.442695
      %v1627 = vpow.pop %v1626
      %v1628 = vmul.f32 %v1419, 1.442695
      %v1629 = vpow.pop %v1628
      %v1630 = vmul.f32 %v1420, 1.442695
      %v1631 = vpow.pop %v1630
      %v1632 = vmul.f32 %v1421, 1.442695
      %v1633 = vpow.pop %v1632
      %v1634 = vmul.f32 %v1422, 1.442695
      %v1635 = vpow.pop %v1634
      %v1636 = vmul.f32 %v1423, 1.442695
      %v1637 = vpow.pop %v1636
      %v1638 = vmul.f32 %v1424, 1.442695
      %v1639 = vpow.pop %v1638
      %v1640 = vmul.f32 %v1425, 1.442695
      %v1641 = vpow.pop %v1640
      %v1642 = vmul.f32 %v1426, 1.442695
      %v1643 = vpow.pop %v1642
      %v1644 = vmul.f32 %v1427, 1.442695
      %v1645 = vpow.pop %v1644
      %v1646 = vmul.f32 %v1428, 1.442695
      %v1647 = vpow.pop %v1646
      %v1648 = vmul.f32 %v1429, 1.442695
      %v1649 = vpow.pop %v1648
      %v1650 = vmul.f32 %v1430, 1.442695
      %v1651 = vpow.pop %v1650
      %v1652 = vmul.f32 %v1431, 1.442695
      %v1653 = vpow.pop %v1652
      %v1654 = vmul.f32 %v1432, 1.442695
      %v1655 = vpow.pop %v1654
      %v1656 = vmul.f32 %v1433, 1.442695
      %v1657 = vpow.pop %v1656
      %v1658 = vmul.f32 %v1434, 1.442695
      %v1659 = vpow.pop %v1658
      %v1660 = vmul.f32 %v1435, 1.442695
      %v1661 = vpow.pop %v1660
      %v1662 = vmul.f32 %v1436, 1.442695
      %v1663 = vpow.pop %v1662
      %v1664 = vmul.f32 %v1437, 1.442695
      %v1665 = vpow.pop %v1664
      %v1666 = vmul.f32 %v1438, 1.442695
      %v1667 = vpow.pop %v1666
      %v1668 = vmul.f32 %v1439, 1.442695
      %v1669 = vpow.pop %v1668
      %v1670 = vmul.f32 %v1440, 1.442695
      %v1671 = vpow.pop %v1670
      %v1672 = vmul.f32 %v1441, 1.442695
      %v1673 = vpow.pop %v1672
      %v1674 = vmul.f32 %v1442, 1.442695
      %v1675 = vpow.pop %v1674
      %v1676 = vmul.f32 %v1443, 1.442695
      %v1677 = vpow.pop %v1676
      %v1678 = vmul.f32 %v1444, 1.442695
      %v1679 = vpow.pop %v1678
      %v1680 = vmul.f32 %v1445, 1.442695
      %v1681 = vpow.pop %v1680
      %v1682 = vmul.f32 %v1446, 1.442695
      %v1683 = vpow.pop %v1682
      %v1684 = vmul.f32 %v1447, 1.442695
      %v1685 = vpow.pop %v1684
      %v1686 = vmul.f32 %v1448, 1.442695
      %v1687 = vpow.pop %v1686
      %v1688 = vmul.f32 %v1449, 1.442695
      %v1689 = vpow.pop %v1688
      %v1690 = vmul.f32 %v1450, 1.442695
      %v1691 = vpow.pop %v1690
      %v1692 = vmul.f32 %v1451, 1.442695
      %v1693 = vpow.pop %v1692
      %v1694 = vmul.f32 %v1452, 1.442695
      %v1695 = vpow.pop %v1694
      %v1696 = vmul.f32 %v1453, 1.442695
      %v1697 = vpow.pop %v1696
      %v1698 = vmul.f32 %v1454, 1.442695
      %v1699 = vpow.pop %v1698
      %v1700 = vmul.f32 %v1455, 1.442695
      %v1701 = vpow.pop %v1700
      %v1702 = vmul.f32 %v1456, 1.442695
      %v1703 = vpow.pop %v1702
      %v1704 = vmul.f32 %v1457, 1.442695
      %v1705 = vpow.pop %v1704
      %v1706 = vmul.f32 %v1458, 1.442695
      %v1707 = vpow.pop %v1706
      %v1708 = vmul.f32 %v1459, 1.442695
      %v1709 = vpow.pop %v1708
      %v1710 = vmul.f32 %v1460, 1.442695
      %v1711 = vpow.pop %v1710
      %v1712 = vmul.f32 %v1461, 1.442695
      %v1713 = vpow.pop %v1712
      %v1714 = vmul.f32 %v1462, 1.442695
      %v1715 = vpow.pop %v1714
      %v1716 = vmul.f32 %v1463, 1.442695
      %v1717 = vpow.pop %v1716
      %v1718 = vmul.f32 %v1464, 1.442695
      %v1719 = vpow.pop %v1718
      %v1720 = vmul.f32 %v1465, 1.442695
      %v1721 = vpow.pop %v1720
      %v1722 = vld [vmem:[%s282] sm:$0xff]
      %v1723 = vld [vmem:[%s282 + $0x8] sm:$0xff]
      %v1724 = vld [vmem:[%s282 + $0x10] sm:$0xff]
      %v1725 = vld [vmem:[%s282 + $0x18] sm:$0xff]
      %v1726 = vld [vmem:[%s282 + $0x20] sm:$0xff]
      %v1727 = vld [vmem:[%s282 + $0x28] sm:$0xff]
      %v1728 = vld [vmem:[%s282 + $0x30] sm:$0xff]
      %v1729 = vld [vmem:[%s282 + $0x38] sm:$0xff]
      %v1730 = vld [vmem:[%s282 + $0x40] sm:$0xff]
      %v1731 = vld [vmem:[%s282 + $0x48] sm:$0xff]
      %v1732 = vld [vmem:[%s282 + $0x50] sm:$0xff]
      %v1733 = vld [vmem:[%s282 + $0x58] sm:$0xff]
      %v1734 = vld [vmem:[%s282 + $0x60] sm:$0xff]
      %v1735 = vld [vmem:[%s282 + $0x68] sm:$0xff]
      %v1736 = vld [vmem:[%s282 + $0x70] sm:$0xff]
      %v1737 = vld [vmem:[%s282 + $0x78] sm:$0xff]
      %v1738 = vld [vmem:[%s282 + $0x80] sm:$0xff]
      %v1739 = vld [vmem:[%s282 + $0x88] sm:$0xff]
      %v1740 = vld [vmem:[%s282 + $0x90] sm:$0xff]
      %v1741 = vld [vmem:[%s282 + $0x98] sm:$0xff]
      %v1742 = vld [vmem:[%s282 + $0xa0] sm:$0xff]
      %v1743 = vld [vmem:[%s282 + $0xa8] sm:$0xff]
      %v1744 = vld [vmem:[%s282 + $0xb0] sm:$0xff]
      %v1745 = vld [vmem:[%s282 + $0xb8] sm:$0xff]
      %v1746 = vld [vmem:[%s282 + $0xc0] sm:$0xff]
      %v1747 = vld [vmem:[%s282 + $0xc8] sm:$0xff]
      %v1748 = vld [vmem:[%s282 + $0xd0] sm:$0xff]
      %v1749 = vld [vmem:[%s282 + $0xd8] sm:$0xff]
      %v1750 = vld [vmem:[%s282 + $0xe0] sm:$0xff]
      %v1751 = vld [vmem:[%s282 + $0xe8] sm:$0xff]
      %v1752 = vld [vmem:[%s282 + $0xf0] sm:$0xff]
      %v1753 = vld [vmem:[%s282 + $0xf8] sm:$0xff]
      %vm1754 = vnez %v1722
      %vm1755 = vnez %v1723
      %vm1756 = vnez %v1724
      %vm1757 = vnez %v1725
      %vm1758 = vnez %v1726
      %vm1759 = vnez %v1727
      %vm1760 = vnez %v1728
      %vm1761 = vnez %v1729
      %vm1762 = vnez %v1730
      %vm1763 = vnez %v1731
      %vm1764 = vnez %v1732
      %vm1765 = vnez %v1733
      %vm1766 = vnez %v1734
      %vm1767 = vnez %v1735
      %vm1768 = vnez %v1736
      %vm1769 = vnez %v1737
      %vm1770 = vnez %v1738
      %vm1771 = vnez %v1739
      %vm1772 = vnez %v1740
      %vm1773 = vnez %v1741
      %vm1774 = vnez %v1742
      %vm1775 = vnez %v1743
      %vm1776 = vnez %v1744
      %vm1777 = vnez %v1745
      %vm1778 = vnez %v1746
      %vm1779 = vnez %v1747
      %vm1780 = vnez %v1748
      %vm1781 = vnez %v1749
      %vm1782 = vnez %v1750
      %vm1783 = vnez %v1751
      %vm1784 = vnez %v1752
      %vm1785 = vnez %v1753
      %v1786 = vmul.f32 %v1467, 1.442695
      %v1787 = vpow.pop %v1786
      %v1788 = vmul.f32 %v1469, 1.442695
      %v1789 = vpow.pop %v1788
      %v1790 = vmul.f32 %v1471, 1.442695
      %v1791 = vpow.pop %v1790
      %v1792 = vmul.f32 %v1473, 1.442695
      %v1793 = vpow.pop %v1792
      %v1794 = vmul.f32 %v1475, 1.442695
      %v1795 = vpow.pop %v1794
      %v1796 = vmul.f32 %v1477, 1.442695
      %v1797 = vpow.pop %v1796
      %v1798 = vmul.f32 %v1479, 1.442695
      %v1799 = vpow.pop %v1798
      %v1800 = vmul.f32 %v1481, 1.442695
      %v1801 = vpow.pop %v1800
      %v1802 = vmul.f32 %v1483, 1.442695
      %v1803 = vpow.pop %v1802
      %v1804 = vmul.f32 %v1485, 1.442695
      %v1805 = vpow.pop %v1804
      %v1806 = vmul.f32 %v1487, 1.442695
      %v1807 = vpow.pop %v1806
      %v1808 = vmul.f32 %v1489, 1.442695
      %v1809 = vpow.pop %v1808
      %v1810 = vmul.f32 %v1491, 1.442695
      %v1811 = vpow.pop %v1810
      %v1812 = vmul.f32 %v1493, 1.442695
      %v1813 = vpow.pop %v1812
      %v1814 = vmul.f32 %v1495, 1.442695
      %v1815 = vpow.pop %v1814
      %v1816 = vmul.f32 %v1497, 1.442695
      %v1817 = vpow.pop %v1816
      %v1818 = vmul.f32 %v1499, 1.442695
      %v1819 = vpow.pop %v1818
      %v1820 = vmul.f32 %v1501, 1.442695
      %v1821 = vpow.pop %v1820
      %v1822 = vmul.f32 %v1503, 1.442695
      %v1823 = vpow.pop %v1822
      %v1824 = vmul.f32 %v1505, 1.442695
      %v1825 = vpow.pop %v1824
      %v1826 = vmul.f32 %v1507, 1.442695
      %v1827 = vpow.pop %v1826
      %v1828 = vmul.f32 %v1509, 1.442695
      %v1829 = vpow.pop %v1828
      %v1830 = vmul.f32 %v1511, 1.442695
      %v1831 = vpow.pop %v1830
      %v1832 = vmul.f32 %v1513, 1.442695
      %v1833 = vpow.pop %v1832
      %v1834 = vmul.f32 %v1515, 1.442695
      %v1835 = vpow.pop %v1834
      %v1836 = vmul.f32 %v1517, 1.442695
      %v1837 = vpow.pop %v1836
      %v1838 = vmul.f32 %v1519, 1.442695
      %v1839 = vpow.pop %v1838
      %v1840 = vmul.f32 %v1521, 1.442695
      %v1841 = vpow.pop %v1840
      %v1842 = vmul.f32 %v1523, 1.442695
      %v1843 = vpow.pop %v1842
      %v1844 = vmul.f32 %v1525, 1.442695
      %v1845 = vpow.pop %v1844
      %v1846 = vmul.f32 %v1527, 1.442695
      %v1847 = vpow.pop %v1846
      %v1848 = vmul.f32 %v1529, 1.442695
      %v1849 = vpow.pop %v1848
      %v1850 = vmul.f32 %v1531, 1.442695
      %v1851 = vpow.pop %v1850
      %v1852 = vmul.f32 %v1533, 1.442695
      %v1853 = vpow.pop %v1852
      %v1854 = vmul.f32 %v1535, 1.442695
      %v1855 = vpow.pop %v1854
      %v1856 = vmul.f32 %v1537, 1.442695
      %v1857 = vpow.pop %v1856
      %v1858 = vmul.f32 %v1539, 1.442695
      %v1859 = vpow.pop %v1858
      %v1860 = vmul.f32 %v1541, 1.442695
      %v1861 = vpow.pop %v1860
      %v1862 = vmul.f32 %v1543, 1.442695
      %v1863 = vpow.pop %v1862
      %v1864 = vmul.f32 %v1545, 1.442695
      %v1865 = vpow.pop %v1864
      %v1866 = vmul.f32 %v1547, 1.442695
      %v1867 = vpow.pop %v1866
      %v1868 = vmul.f32 %v1549, 1.442695
      %v1869 = vpow.pop %v1868
      %v1870 = vmul.f32 %v1551, 1.442695
      %v1871 = vpow.pop %v1870
      %v1872 = vmul.f32 %v1553, 1.442695
      %v1873 = vpow.pop %v1872
      %v1874 = vmul.f32 %v1555, 1.442695
      %v1875 = vpow.pop %v1874
      %v1876 = vmul.f32 %v1557, 1.442695
      %v1877 = vpow.pop %v1876
      %v1878 = vmul.f32 %v1559, 1.442695
      %v1879 = vpow.pop %v1878
      %v1880 = vmul.f32 %v1561, 1.442695
      %v1881 = vpow.pop %v1880
      %v1882 = vmul.f32 %v1563, 1.442695
      %v1883 = vpow.pop %v1882
      %v1884 = vmul.f32 %v1565, 1.442695
      %v1885 = vpow.pop %v1884
      %v1886 = vmul.f32 %v1567, 1.442695
      %v1887 = vpow.pop %v1886
      %v1888 = vmul.f32 %v1569, 1.442695
      %v1889 = vpow.pop %v1888
      %v1890 = vmul.f32 %v1571, 1.442695
      %v1891 = vpow.pop %v1890
      %v1892 = vmul.f32 %v1573, 1.442695
      %v1893 = vpow.pop %v1892
      %v1894 = vmul.f32 %v1575, 1.442695
      %v1895 = vpow.pop %v1894
      %v1896 = vmul.f32 %v1577, 1.442695
      %v1897 = vpow.pop %v1896
      %v1898 = vmul.f32 %v1579, 1.442695
      %v1899 = vpow.pop %v1898
      %v1900 = vmul.f32 %v1581, 1.442695
      %v1901 = vpow.pop %v1900
      %v1902 = vmul.f32 %v1583, 1.442695
      %v1903 = vpow.pop %v1902
      %v1904 = vmul.f32 %v1585, 1.442695
      %v1905 = vpow.pop %v1904
      %v1906 = vmul.f32 %v1587, 1.442695
      %v1907 = vpow.pop %v1906
      %v1908 = vmul.f32 %v1589, 1.442695
      %v1909 = vpow.pop %v1908
      %v1910 = vmul.f32 %v1591, 1.442695
      %v1911 = vpow.pop %v1910
      %v1912 = vmul.f32 %v1593, 1.442695
      %v1913 = vpow.pop %v1912
      %v1914 = vmul.f32 %v1595, 1.442695
      %v1915 = vpow.pop %v1914
      %v1916 = vmul.f32 %v1597, 1.442695
      %v1917 = vpow.pop %v1916
      %v1918 = vmul.f32 %v1599, 1.442695
      %v1919 = vpow.pop %v1918
      %v1920 = vmul.f32 %v1601, 1.442695
      %v1921 = vpow.pop %v1920
      %v1922 = vmul.f32 %v1603, 1.442695
      %v1923 = vpow.pop %v1922
      %v1924 = vmul.f32 %v1605, 1.442695
      %v1925 = vpow.pop %v1924
      %v1926 = vmul.f32 %v1607, 1.442695
      %v1927 = vpow.pop %v1926
      %v1928 = vmul.f32 %v1609, 1.442695
      %v1929 = vpow.pop %v1928
      %v1930 = vmul.f32 %v1611, 1.442695
      %v1931 = vpow.pop %v1930
      %v1932 = vmul.f32 %v1613, 1.442695
      %v1933 = vpow.pop %v1932
      %v1934 = vmul.f32 %v1615, 1.442695
      %v1935 = vpow.pop %v1934
      %v1936 = vmul.f32 %v1617, 1.442695
      %v1937 = vpow.pop %v1936
      %v1938 = vmul.f32 %v1619, 1.442695
      %v1939 = vpow.pop %v1938
      %v1940 = vmul.f32 %v1621, 1.442695
      %v1941 = vpow.pop %v1940
      %v1942 = vmul.f32 %v1623, 1.442695
      %v1943 = vpow.pop %v1942
      %v1944 = vmul.f32 %v1625, 1.442695
      %v1945 = vpow.pop %v1944
      %v1946 = vmul.f32 %v1627, 1.442695
      %v1947 = vpow.pop %v1946
      %v1948 = vmul.f32 %v1629, 1.442695
      %v1949 = vpow.pop %v1948
      %v1950 = vmul.f32 %v1631, 1.442695
      %v1951 = vpow.pop %v1950
      %v1952 = vmul.f32 %v1633, 1.442695
      %v1953 = vpow.pop %v1952
      %v1954 = vmul.f32 %v1635, 1.442695
      %v1955 = vpow.pop %v1954
      %v1956 = vmul.f32 %v1637, 1.442695
      %v1957 = vpow.pop %v1956
      %v1958 = vmul.f32 %v1639, 1.442695
      %v1959 = vpow.pop %v1958
      %v1960 = vmul.f32 %v1641, 1.442695
      %v1961 = vpow.pop %v1960
      %v1962 = vmul.f32 %v1643, 1.442695
      %v1963 = vpow.pop %v1962
      %v1964 = vmul.f32 %v1645, 1.442695
      %v1965 = vpow.pop %v1964
      %v1966 = vmul.f32 %v1647, 1.442695
      %v1967 = vpow.pop %v1966
      %v1968 = vmul.f32 %v1649, 1.442695
      %v1969 = vpow.pop %v1968
      %v1970 = vmul.f32 %v1651, 1.442695
      %v1971 = vpow.pop %v1970
      %v1972 = vmul.f32 %v1653, 1.442695
      %v1973 = vpow.pop %v1972
      %v1974 = vmul.f32 %v1655, 1.442695
      %v1975 = vpow.pop %v1974
      %v1976 = vmul.f32 %v1657, 1.442695
      %v1977 = vpow.pop %v1976
      %v1978 = vmul.f32 %v1659, 1.442695
      %v1979 = vpow.pop %v1978
      %v1980 = vmul.f32 %v1661, 1.442695
      %v1981 = vpow.pop %v1980
      %v1982 = vmul.f32 %v1663, 1.442695
      %v1983 = vpow.pop %v1982
      %v1984 = vmul.f32 %v1665, 1.442695
      %v1985 = vpow.pop %v1984
      %v1986 = vmul.f32 %v1667, 1.442695
      %v1987 = vpow.pop %v1986
      %v1988 = vmul.f32 %v1669, 1.442695
      %v1989 = vpow.pop %v1988
      %v1990 = vmul.f32 %v1671, 1.442695
      %v1991 = vpow.pop %v1990
      %v1992 = vmul.f32 %v1673, 1.442695
      %v1993 = vpow.pop %v1992
      %v1994 = vmul.f32 %v1675, 1.442695
      %v1995 = vpow.pop %v1994
      %v1996 = vmul.f32 %v1677, 1.442695
      %v1997 = vpow.pop %v1996
      %v1998 = vmul.f32 %v1679, 1.442695
      %v1999 = vpow.pop %v1998
      %v2000 = vmul.f32 %v1681, 1.442695
      %v2001 = vpow.pop %v2000
      %v2002 = vmul.f32 %v1683, 1.442695
      %v2003 = vpow.pop %v2002
      %v2004 = vmul.f32 %v1685, 1.442695
      %v2005 = vpow.pop %v2004
      %v2006 = vmul.f32 %v1687, 1.442695
      %v2007 = vpow.pop %v2006
      %v2008 = vmul.f32 %v1689, 1.442695
      %v2009 = vpow.pop %v2008
      %v2010 = vmul.f32 %v1691, 1.442695
      %v2011 = vpow.pop %v2010
      %v2012 = vmul.f32 %v1693, 1.442695
      %v2013 = vpow.pop %v2012
      %v2014 = vmul.f32 %v1695, 1.442695
      %v2015 = vpow.pop %v2014
      %v2016 = vmul.f32 %v1697, 1.442695
      %v2017 = vpow.pop %v2016
      %v2018 = vmul.f32 %v1699, 1.442695
      %v2019 = vpow.pop %v2018
      %v2020 = vmul.f32 %v1701, 1.442695
      %v2021 = vpow.pop %v2020
      %v2022 = vmul.f32 %v1703, 1.442695
      %v2023 = vpow.pop %v2022
      %v2024 = vmul.f32 %v1705, 1.442695
      %v2025 = vpow.pop %v2024
      %v2026 = vmul.f32 %v1707, 1.442695
      %v2027 = vpow.pop %v2026
      %v2028 = vmul.f32 %v1709, 1.442695
      %v2029 = vpow.pop %v2028
      %v2030 = vmul.f32 %v1711, 1.442695
      %v2031 = vpow.pop %v2030
      %v2032 = vmul.f32 %v1713, 1.442695
      %v2033 = vpow.pop %v2032
      %v2034 = vmul.f32 %v1715, 1.442695
      %v2035 = vpow.pop %v2034
      %v2036 = vmul.f32 %v1717, 1.442695
      %v2037 = vpow.pop %v2036
      %v2038 = vmul.f32 %v1719, 1.442695
      %v2039 = vpow.pop %v2038
      %v2040 = vmul.f32 %v1721, 1.442695
      %v2041 = vpow.pop %v2040
      %v2042 = vsel %vm1754, 16843009, 0
      %v2043 = vsel %vm1755, 16843009, 0
      %v2044 = vsel %vm1756, 16843009, 0
      %v2045 = vsel %vm1757, 16843009, 0
      %v2046 = vsel %vm1758, 16843009, 0
      %v2047 = vsel %vm1759, 16843009, 0
      %v2048 = vsel %vm1760, 16843009, 0
      %v2049 = vsel %vm1761, 16843009, 0
      %v2050 = vsel %vm1762, 16843009, 0
      %v2051 = vsel %vm1763, 16843009, 0
      %v2052 = vsel %vm1764, 16843009, 0
      %v2053 = vsel %vm1765, 16843009, 0
      %v2054 = vsel %vm1766, 16843009, 0
      %v2055 = vsel %vm1767, 16843009, 0
      %v2056 = vsel %vm1768, 16843009, 0
      %v2057 = vsel %vm1769, 16843009, 0
      %v2058 = vsel %vm1770, 16843009, 0
      %v2059 = vsel %vm1771, 16843009, 0
      %v2060 = vsel %vm1772, 16843009, 0
      %v2061 = vsel %vm1773, 16843009, 0
      %v2062 = vsel %vm1774, 16843009, 0
      %v2063 = vsel %vm1775, 16843009, 0
      %v2064 = vsel %vm1776, 16843009, 0
      %v2065 = vsel %vm1777, 16843009, 0
      %v2066 = vsel %vm1778, 16843009, 0
      %v2067 = vsel %vm1779, 16843009, 0
      %v2068 = vsel %vm1780, 16843009, 0
      %v2069 = vsel %vm1781, 16843009, 0
      %v2070 = vsel %vm1782, 16843009, 0
      %v2071 = vsel %vm1783, 16843009, 0
      %v2072 = vsel %vm1784, 16843009, 0
      %v2073 = vsel %vm1785, 16843009, 0
      %v2074 = vunpack.c.0.s8 %v2042
      %v2075 = vunpack.c.0.s8 %v2043
      %v2076 = vunpack.c.0.s8 %v2044
      %v2077 = vunpack.c.0.s8 %v2045
      %v2078 = vunpack.c.1.s8 %v2042
      %v2079 = vunpack.c.1.s8 %v2043
      %v2080 = vunpack.c.1.s8 %v2044
      %v2081 = vunpack.c.1.s8 %v2045
      %v2082 = vunpack.c.2.s8 %v2042
      %v2083 = vunpack.c.2.s8 %v2043
      %v2084 = vunpack.c.2.s8 %v2044
      %v2085 = vunpack.c.2.s8 %v2045
      %v2086 = vunpack.c.3.s8 %v2042
      %v2087 = vunpack.c.3.s8 %v2043
      %v2088 = vunpack.c.3.s8 %v2044
      %v2089 = vunpack.c.3.s8 %v2045
      %v2090 = vunpack.c.0.s8 %v2046
      %v2091 = vunpack.c.0.s8 %v2047
      %v2092 = vunpack.c.0.s8 %v2048
      %v2093 = vunpack.c.0.s8 %v2049
      %v2094 = vunpack.c.1.s8 %v2046
      %v2095 = vunpack.c.1.s8 %v2047
      %v2096 = vunpack.c.1.s8 %v2048
      %v2097 = vunpack.c.1.s8 %v2049
      %v2098 = vunpack.c.2.s8 %v2046
      %v2099 = vunpack.c.2.s8 %v2047
      %v2100 = vunpack.c.2.s8 %v2048
      %v2101 = vunpack.c.2.s8 %v2049
      %v2102 = vunpack.c.3.s8 %v2046
      %v2103 = vunpack.c.3.s8 %v2047
      %v2104 = vunpack.c.3.s8 %v2048
      %v2105 = vunpack.c.3.s8 %v2049
      %v2106 = vunpack.c.0.s8 %v2050
      %v2107 = vunpack.c.0.s8 %v2051
      %v2108 = vunpack.c.0.s8 %v2052
      %v2109 = vunpack.c.0.s8 %v2053
      %v2110 = vunpack.c.1.s8 %v2050
      %v2111 = vunpack.c.1.s8 %v2051
      %v2112 = vunpack.c.1.s8 %v2052
      %v2113 = vunpack.c.1.s8 %v2053
      %v2114 = vunpack.c.2.s8 %v2050
      %v2115 = vunpack.c.2.s8 %v2051
      %v2116 = vunpack.c.2.s8 %v2052
      %v2117 = vunpack.c.2.s8 %v2053
      %v2118 = vunpack.c.3.s8 %v2050
      %v2119 = vunpack.c.3.s8 %v2051
      %v2120 = vunpack.c.3.s8 %v2052
      %v2121 = vunpack.c.3.s8 %v2053
      %v2122 = vunpack.c.0.s8 %v2054
      %v2123 = vunpack.c.0.s8 %v2055
      %v2124 = vunpack.c.0.s8 %v2056
      %v2125 = vunpack.c.0.s8 %v2057
      %v2126 = vunpack.c.1.s8 %v2054
      %v2127 = vunpack.c.1.s8 %v2055
      %v2128 = vunpack.c.1.s8 %v2056
      %v2129 = vunpack.c.1.s8 %v2057
      %v2130 = vunpack.c.2.s8 %v2054
      %v2131 = vunpack.c.2.s8 %v2055
      %v2132 = vunpack.c.2.s8 %v2056
      %v2133 = vunpack.c.2.s8 %v2057
      %v2134 = vunpack.c.3.s8 %v2054
      %v2135 = vunpack.c.3.s8 %v2055
      %v2136 = vunpack.c.3.s8 %v2056
      %v2137 = vunpack.c.3.s8 %v2057
      %v2138 = vunpack.c.0.s8 %v2058
      %v2139 = vunpack.c.0.s8 %v2059
      %v2140 = vunpack.c.0.s8 %v2060
      %v2141 = vunpack.c.0.s8 %v2061
      %v2142 = vunpack.c.1.s8 %v2058
      %v2143 = vunpack.c.1.s8 %v2059
      %v2144 = vunpack.c.1.s8 %v2060
      %v2145 = vunpack.c.1.s8 %v2061
      %v2146 = vunpack.c.2.s8 %v2058
      %v2147 = vunpack.c.2.s8 %v2059
      %v2148 = vunpack.c.2.s8 %v2060
      %v2149 = vunpack.c.2.s8 %v2061
      %v2150 = vunpack.c.3.s8 %v2058
      %v2151 = vunpack.c.3.s8 %v2059
      %v2152 = vunpack.c.3.s8 %v2060
      %v2153 = vunpack.c.3.s8 %v2061
      %v2154 = vunpack.c.0.s8 %v2062
      %v2155 = vunpack.c.0.s8 %v2063
      %v2156 = vunpack.c.0.s8 %v2064
      %v2157 = vunpack.c.0.s8 %v2065
      %v2158 = vunpack.c.1.s8 %v2062
      %v2159 = vunpack.c.1.s8 %v2063
      %v2160 = vunpack.c.1.s8 %v2064
      %v2161 = vunpack.c.1.s8 %v2065
      %v2162 = vunpack.c.2.s8 %v2062
      %v2163 = vunpack.c.2.s8 %v2063
      %v2164 = vunpack.c.2.s8 %v2064
      %v2165 = vunpack.c.2.s8 %v2065
      %v2166 = vunpack.c.3.s8 %v2062
      %v2167 = vunpack.c.3.s8 %v2063
      %v2168 = vunpack.c.3.s8 %v2064
      %v2169 = vunpack.c.3.s8 %v2065
      %v2170 = vunpack.c.0.s8 %v2066
      %v2171 = vunpack.c.0.s8 %v2067
      %v2172 = vunpack.c.0.s8 %v2068
      %v2173 = vunpack.c.0.s8 %v2069
      %v2174 = vunpack.c.1.s8 %v2066
      %v2175 = vunpack.c.1.s8 %v2067
      %v2176 = vunpack.c.1.s8 %v2068
      %v2177 = vunpack.c.1.s8 %v2069
      %v2178 = vunpack.c.2.s8 %v2066
      %v2179 = vunpack.c.2.s8 %v2067
      %v2180 = vunpack.c.2.s8 %v2068
      %v2181 = vunpack.c.2.s8 %v2069
      %v2182 = vunpack.c.3.s8 %v2066
      %v2183 = vunpack.c.3.s8 %v2067
      %v2184 = vunpack.c.3.s8 %v2068
      %v2185 = vunpack.c.3.s8 %v2069
      %v2186 = vunpack.c.0.s8 %v2070
      %v2187 = vunpack.c.0.s8 %v2071
      %v2188 = vunpack.c.0.s8 %v2072
      %v2189 = vunpack.c.0.s8 %v2073
      %v2190 = vunpack.c.1.s8 %v2070
      %v2191 = vunpack.c.1.s8 %v2071
      %v2192 = vunpack.c.1.s8 %v2072
      %v2193 = vunpack.c.1.s8 %v2073
      %v2194 = vunpack.c.2.s8 %v2070
      %v2195 = vunpack.c.2.s8 %v2071
      %v2196 = vunpack.c.2.s8 %v2072
      %v2197 = vunpack.c.2.s8 %v2073
      %v2198 = vunpack.c.3.s8 %v2070
      %v2199 = vunpack.c.3.s8 %v2071
      %v2200 = vunpack.c.3.s8 %v2072
      %v2201 = vunpack.c.3.s8 %v2073
      %v2202 = vpack.c.b16 %v2075, %v2074
      %v2203 = vpack.c.b16 %v2077, %v2076
      %v2204 = vpack.c.b8 %v2203, %v2202
      %v2205 = vpack.c.b16 %v2079, %v2078
      %v2206 = vpack.c.b16 %v2081, %v2080
      %v2207 = vpack.c.b8 %v2206, %v2205
      %v2208 = vpack.c.b16 %v2083, %v2082
      %v2209 = vpack.c.b16 %v2085, %v2084
      %v2210 = vpack.c.b8 %v2209, %v2208
      %v2211 = vpack.c.b16 %v2087, %v2086
      %v2212 = vpack.c.b16 %v2089, %v2088
      %v2213 = vpack.c.b8 %v2212, %v2211
      %v2214 = vpack.c.b16 %v2091, %v2090
      %v2215 = vpack.c.b16 %v2093, %v2092
      %v2216 = vpack.c.b8 %v2215, %v2214
      %v2217 = vpack.c.b16 %v2095, %v2094
      %v2218 = vpack.c.b16 %v2097, %v2096
      %v2219 = vpack.c.b8 %v2218, %v2217
      %v2220 = vpack.c.b16 %v2099, %v2098
      %v2221 = vpack.c.b16 %v2101, %v2100
      %v2222 = vpack.c.b8 %v2221, %v2220
      %v2223 = vpack.c.b16 %v2103, %v2102
      %v2224 = vpack.c.b16 %v2105, %v2104
      %v2225 = vpack.c.b8 %v2224, %v2223
      %v2226 = vpack.c.b16 %v2107, %v2106
      %v2227 = vpack.c.b16 %v2109, %v2108
      %v2228 = vpack.c.b8 %v2227, %v2226
      %v2229 = vpack.c.b16 %v2111, %v2110
      %v2230 = vpack.c.b16 %v2113, %v2112
      %v2231 = vpack.c.b8 %v2230, %v2229
      %v2232 = vpack.c.b16 %v2115, %v2114
      %v2233 = vpack.c.b16 %v2117, %v2116
      %v2234 = vpack.c.b8 %v2233, %v2232
      %v2235 = vpack.c.b16 %v2119, %v2118
      %v2236 = vpack.c.b16 %v2121, %v2120
      %v2237 = vpack.c.b8 %v2236, %v2235
      %v2238 = vpack.c.b16 %v2123, %v2122
      %v2239 = vpack.c.b16 %v2125, %v2124
      %v2240 = vpack.c.b8 %v2239, %v2238
      %v2241 = vpack.c.b16 %v2127, %v2126
      %v2242 = vpack.c.b16 %v2129, %v2128
      %v2243 = vpack.c.b8 %v2242, %v2241
      %v2244 = vpack.c.b16 %v2131, %v2130
      %v2245 = vpack.c.b16 %v2133, %v2132
      %v2246 = vpack.c.b8 %v2245, %v2244
      %v2247 = vpack.c.b16 %v2135, %v2134
      %v2248 = vpack.c.b16 %v2137, %v2136
      %v2249 = vpack.c.b8 %v2248, %v2247
      %v2250 = vpack.c.b16 %v2139, %v2138
      %v2251 = vpack.c.b16 %v2141, %v2140
      %v2252 = vpack.c.b8 %v2251, %v2250
      %v2253 = vpack.c.b16 %v2143, %v2142
      %v2254 = vpack.c.b16 %v2145, %v2144
      %v2255 = vpack.c.b8 %v2254, %v2253
      %v2256 = vpack.c.b16 %v2147, %v2146
      %v2257 = vpack.c.b16 %v2149, %v2148
      %v2258 = vpack.c.b8 %v2257, %v2256
      %v2259 = vpack.c.b16 %v2151, %v2150
      %v2260 = vpack.c.b16 %v2153, %v2152
      %v2261 = vpack.c.b8 %v2260, %v2259
      %v2262 = vpack.c.b16 %v2155, %v2154
      %v2263 = vpack.c.b16 %v2157, %v2156
      %v2264 = vpack.c.b8 %v2263, %v2262
      %v2265 = vpack.c.b16 %v2159, %v2158
      %v2266 = vpack.c.b16 %v2161, %v2160
      %v2267 = vpack.c.b8 %v2266, %v2265
      %v2268 = vpack.c.b16 %v2163, %v2162
      %v2269 = vpack.c.b16 %v2165, %v2164
      %v2270 = vpack.c.b8 %v2269, %v2268
      %v2271 = vpack.c.b16 %v2167, %v2166
      %v2272 = vpack.c.b16 %v2169, %v2168
      %v2273 = vpack.c.b8 %v2272, %v2271
      %v2274 = vpack.c.b16 %v2171, %v2170
      %v2275 = vpack.c.b16 %v2173, %v2172
      %v2276 = vpack.c.b8 %v2275, %v2274
      %v2277 = vpack.c.b16 %v2175, %v2174
      %v2278 = vpack.c.b16 %v2177, %v2176
      %v2279 = vpack.c.b8 %v2278, %v2277
      %v2280 = vpack.c.b16 %v2179, %v2178
      %v2281 = vpack.c.b16 %v2181, %v2180
      %v2282 = vpack.c.b8 %v2281, %v2280
      %v2283 = vpack.c.b16 %v2183, %v2182
      %v2284 = vpack.c.b16 %v2185, %v2184
      %v2285 = vpack.c.b8 %v2284, %v2283
      %v2286 = vpack.c.b16 %v2187, %v2186
      %v2287 = vpack.c.b16 %v2189, %v2188
      %v2288 = vpack.c.b8 %v2287, %v2286
      %v2289 = vpack.c.b16 %v2191, %v2190
      %v2290 = vpack.c.b16 %v2193, %v2192
      %v2291 = vpack.c.b8 %v2290, %v2289
      %v2292 = vpack.c.b16 %v2195, %v2194
      %v2293 = vpack.c.b16 %v2197, %v2196
      %v2294 = vpack.c.b8 %v2293, %v2292
      %v2295 = vpack.c.b16 %v2199, %v2198
      %v2296 = vpack.c.b16 %v2201, %v2200
      %v2297 = vpack.c.b8 %v2296, %v2295
      %vm2298 = vnez %v2204
      %vm2299 = vnez %v2207
      %vm2300 = vnez %v2210
      %vm2301 = vnez %v2213
      %vm2302 = vnez %v2216
      %vm2303 = vnez %v2219
      %vm2304 = vnez %v2222
      %vm2305 = vnez %v2225
      %vm2306 = vnez %v2228
      %vm2307 = vnez %v2231
      %vm2308 = vnez %v2234
      %vm2309 = vnez %v2237
      %vm2310 = vnez %v2240
      %vm2311 = vnez %v2243
      %vm2312 = vnez %v2246
      %vm2313 = vnez %v2249
      %vm2314 = vnez %v2252
      %vm2315 = vnez %v2255
      %vm2316 = vnez %v2258
      %vm2317 = vnez %v2261
      %vm2318 = vnez %v2264
      %vm2319 = vnez %v2267
      %vm2320 = vnez %v2270
      %vm2321 = vnez %v2273
      %vm2322 = vnez %v2276
      %vm2323 = vnez %v2279
      %vm2324 = vnez %v2282
      %vm2325 = vnez %v2285
      %vm2326 = vnez %v2288
      %vm2327 = vnez %v2291
      %vm2328 = vnez %v2294
      %vm2329 = vnez %v2297
      %v2330 = vsel %vm2298, 16843009, 0
      %v2331 = vsel %vm2299, 16843009, 0
      %v2332 = vsel %vm2300, 16843009, 0
      %v2333 = vsel %vm2301, 16843009, 0
      %v2334 = vsel %vm2302, 16843009, 0
      %v2335 = vsel %vm2303, 16843009, 0
      %v2336 = vsel %vm2304, 16843009, 0
      %v2337 = vsel %vm2305, 16843009, 0
      %v2338 = vsel %vm2306, 16843009, 0
      %v2339 = vsel %vm2307, 16843009, 0
      %v2340 = vsel %vm2308, 16843009, 0
      %v2341 = vsel %vm2309, 16843009, 0
      %v2342 = vsel %vm2310, 16843009, 0
      %v2343 = vsel %vm2311, 16843009, 0
      %v2344 = vsel %vm2312, 16843009, 0
      %v2345 = vsel %vm2313, 16843009, 0
      %v2346 = vsel %vm2314, 16843009, 0
      %v2347 = vsel %vm2315, 16843009, 0
      %v2348 = vsel %vm2316, 16843009, 0
      %v2349 = vsel %vm2317, 16843009, 0
      %v2350 = vsel %vm2318, 16843009, 0
      %v2351 = vsel %vm2319, 16843009, 0
      %v2352 = vsel %vm2320, 16843009, 0
      %v2353 = vsel %vm2321, 16843009, 0
      %v2354 = vsel %vm2322, 16843009, 0
      %v2355 = vsel %vm2323, 16843009, 0
      %v2356 = vsel %vm2324, 16843009, 0
      %v2357 = vsel %vm2325, 16843009, 0
      %v2358 = vsel %vm2326, 16843009, 0
      %v2359 = vsel %vm2327, 16843009, 0
      %v2360 = vsel %vm2328, 16843009, 0
      %v2361 = vsel %vm2329, 16843009, 0
      %v2362 = vunpack.c.0.s8 %v2330
      %v2363 = vunpack.c.1.s8 %v2330
      %v2364 = vunpack.c.2.s8 %v2330
      %v2365 = vunpack.c.3.s8 %v2330
      %v2366 = vunpack.c.0.s8 %v2331
      %v2367 = vunpack.c.1.s8 %v2331
      %v2368 = vunpack.c.2.s8 %v2331
      %v2369 = vunpack.c.3.s8 %v2331
      %v2370 = vunpack.c.0.s8 %v2332
      %v2371 = vunpack.c.1.s8 %v2332
      %v2372 = vunpack.c.2.s8 %v2332
      %v2373 = vunpack.c.3.s8 %v2332
      %v2374 = vunpack.c.0.s8 %v2333
      %v2375 = vunpack.c.1.s8 %v2333
      %v2376 = vunpack.c.2.s8 %v2333
      %v2377 = vunpack.c.3.s8 %v2333
      %v2378 = vunpack.c.0.s8 %v2334
      %v2379 = vunpack.c.1.s8 %v2334
      %v2380 = vunpack.c.2.s8 %v2334
      %v2381 = vunpack.c.3.s8 %v2334
      %v2382 = vunpack.c.0.s8 %v2335
      %v2383 = vunpack.c.1.s8 %v2335
      %v2384 = vunpack.c.2.s8 %v2335
      %v2385 = vunpack.c.3.s8 %v2335
      %v2386 = vunpack.c.0.s8 %v2336
      %v2387 = vunpack.c.1.s8 %v2336
      %v2388 = vunpack.c.2.s8 %v2336
      %v2389 = vunpack.c.3.s8 %v2336
      %v2390 = vunpack.c.0.s8 %v2337
      %v2391 = vunpack.c.1.s8 %v2337
      %v2392 = vunpack.c.2.s8 %v2337
      %v2393 = vunpack.c.3.s8 %v2337
      %v2394 = vunpack.c.0.s8 %v2338
      %v2395 = vunpack.c.1.s8 %v2338
      %v2396 = vunpack.c.2.s8 %v2338
      %v2397 = vunpack.c.3.s8 %v2338
      %v2398 = vunpack.c.0.s8 %v2339
      %v2399 = vunpack.c.1.s8 %v2339
      %v2400 = vunpack.c.2.s8 %v2339
      %v2401 = vunpack.c.3.s8 %v2339
      %v2402 = vunpack.c.0.s8 %v2340
      %v2403 = vunpack.c.1.s8 %v2340
      %v2404 = vunpack.c.2.s8 %v2340
      %v2405 = vunpack.c.3.s8 %v2340
      %v2406 = vunpack.c.0.s8 %v2341
      %v2407 = vunpack.c.1.s8 %v2341
      %v2408 = vunpack.c.2.s8 %v2341
      %v2409 = vunpack.c.3.s8 %v2341
      %v2410 = vunpack.c.0.s8 %v2342
      %v2411 = vunpack.c.1.s8 %v2342
      %v2412 = vunpack.c.2.s8 %v2342
      %v2413 = vunpack.c.3.s8 %v2342
      %v2414 = vunpack.c.0.s8 %v2343
      %v2415 = vunpack.c.1.s8 %v2343
      %v2416 = vunpack.c.2.s8 %v2343
      %v2417 = vunpack.c.3.s8 %v2343
      %v2418 = vunpack.c.0.s8 %v2344
      %v2419 = vunpack.c.1.s8 %v2344
      %v2420 = vunpack.c.2.s8 %v2344
      %v2421 = vunpack.c.3.s8 %v2344
      %v2422 = vunpack.c.0.s8 %v2345
      %v2423 = vunpack.c.1.s8 %v2345
      %v2424 = vunpack.c.2.s8 %v2345
      %v2425 = vunpack.c.3.s8 %v2345
      %v2426 = vunpack.c.0.s8 %v2346
      %v2427 = vunpack.c.1.s8 %v2346
      %v2428 = vunpack.c.2.s8 %v2346
      %v2429 = vunpack.c.3.s8 %v2346
      %v2430 = vunpack.c.0.s8 %v2347
      %v2431 = vunpack.c.1.s8 %v2347
      %v2432 = vunpack.c.2.s8 %v2347
      %v2433 = vunpack.c.3.s8 %v2347
      %v2434 = vunpack.c.0.s8 %v2348
      %v2435 = vunpack.c.1.s8 %v2348
      %v2436 = vunpack.c.2.s8 %v2348
      %v2437 = vunpack.c.3.s8 %v2348
      %v2438 = vunpack.c.0.s8 %v2349
      %v2439 = vunpack.c.1.s8 %v2349
      %v2440 = vunpack.c.2.s8 %v2349
      %v2441 = vunpack.c.3.s8 %v2349
      %v2442 = vunpack.c.0.s8 %v2350
      %v2443 = vunpack.c.1.s8 %v2350
      %v2444 = vunpack.c.2.s8 %v2350
      %v2445 = vunpack.c.3.s8 %v2350
      %v2446 = vunpack.c.0.s8 %v2351
      %v2447 = vunpack.c.1.s8 %v2351
      %v2448 = vunpack.c.2.s8 %v2351
      %v2449 = vunpack.c.3.s8 %v2351
      %v2450 = vunpack.c.0.s8 %v2352
      %v2451 = vunpack.c.1.s8 %v2352
      %v2452 = vunpack.c.2.s8 %v2352
      %v2453 = vunpack.c.3.s8 %v2352
      %v2454 = vunpack.c.0.s8 %v2353
      %v2455 = vunpack.c.1.s8 %v2353
      %v2456 = vunpack.c.2.s8 %v2353
      %v2457 = vunpack.c.3.s8 %v2353
      %v2458 = vunpack.c.0.s8 %v2354
      %v2459 = vunpack.c.1.s8 %v2354
      %v2460 = vunpack.c.2.s8 %v2354
      %v2461 = vunpack.c.3.s8 %v2354
      %v2462 = vunpack.c.0.s8 %v2355
      %v2463 = vunpack.c.1.s8 %v2355
      %v2464 = vunpack.c.2.s8 %v2355
      %v2465 = vunpack.c.3.s8 %v2355
      %v2466 = vunpack.c.0.s8 %v2356
      %v2467 = vunpack.c.1.s8 %v2356
      %v2468 = vunpack.c.2.s8 %v2356
      %v2469 = vunpack.c.3.s8 %v2356
      %v2470 = vunpack.c.0.s8 %v2357
      %v2471 = vunpack.c.1.s8 %v2357
      %v2472 = vunpack.c.2.s8 %v2357
      %v2473 = vunpack.c.3.s8 %v2357
      %v2474 = vunpack.c.0.s8 %v2358
      %v2475 = vunpack.c.1.s8 %v2358
      %v2476 = vunpack.c.2.s8 %v2358
      %v2477 = vunpack.c.3.s8 %v2358
      %v2478 = vunpack.c.0.s8 %v2359
      %v2479 = vunpack.c.1.s8 %v2359
      %v2480 = vunpack.c.2.s8 %v2359
      %v2481 = vunpack.c.3.s8 %v2359
      %v2482 = vunpack.c.0.s8 %v2360
      %v2483 = vunpack.c.1.s8 %v2360
      %v2484 = vunpack.c.2.s8 %v2360
      %v2485 = vunpack.c.3.s8 %v2360
      %v2486 = vunpack.c.0.s8 %v2361
      %v2487 = vunpack.c.1.s8 %v2361
      %v2488 = vunpack.c.2.s8 %v2361
      %v2489 = vunpack.c.3.s8 %v2361
      %vm2490 = vcmp.ne.s32.totalorder %v2362, 0
      %vm2491 = vcmp.ne.s32.totalorder %v2363, 0
      %vm2492 = vcmp.ne.s32.totalorder %v2364, 0
      %vm2493 = vcmp.ne.s32.totalorder %v2365, 0
      %vm2494 = vcmp.ne.s32.totalorder %v2366, 0
      %vm2495 = vcmp.ne.s32.totalorder %v2367, 0
      %vm2496 = vcmp.ne.s32.totalorder %v2368, 0
      %vm2497 = vcmp.ne.s32.totalorder %v2369, 0
      %vm2498 = vcmp.ne.s32.totalorder %v2370, 0
      %vm2499 = vcmp.ne.s32.totalorder %v2371, 0
      %vm2500 = vcmp.ne.s32.totalorder %v2372, 0
      %vm2501 = vcmp.ne.s32.totalorder %v2373, 0
      %vm2502 = vcmp.ne.s32.totalorder %v2374, 0
      %vm2503 = vcmp.ne.s32.totalorder %v2375, 0
      %vm2504 = vcmp.ne.s32.totalorder %v2376, 0
      %vm2505 = vcmp.ne.s32.totalorder %v2377, 0
      %vm2506 = vcmp.ne.s32.totalorder %v2378, 0
      %vm2507 = vcmp.ne.s32.totalorder %v2379, 0
      %vm2508 = vcmp.ne.s32.totalorder %v2380, 0
      %vm2509 = vcmp.ne.s32.totalorder %v2381, 0
      %vm2510 = vcmp.ne.s32.totalorder %v2382, 0
      %vm2511 = vcmp.ne.s32.totalorder %v2383, 0
      %vm2512 = vcmp.ne.s32.totalorder %v2384, 0
      %vm2513 = vcmp.ne.s32.totalorder %v2385, 0
      %vm2514 = vcmp.ne.s32.totalorder %v2386, 0
      %vm2515 = vcmp.ne.s32.totalorder %v2387, 0
      %vm2516 = vcmp.ne.s32.totalorder %v2388, 0
      %vm2517 = vcmp.ne.s32.totalorder %v2389, 0
      %vm2518 = vcmp.ne.s32.totalorder %v2390, 0
      %vm2519 = vcmp.ne.s32.totalorder %v2391, 0
      %vm2520 = vcmp.ne.s32.totalorder %v2392, 0
      %vm2521 = vcmp.ne.s32.totalorder %v2393, 0
      %vm2522 = vcmp.ne.s32.totalorder %v2394, 0
      %vm2523 = vcmp.ne.s32.totalorder %v2395, 0
      %vm2524 = vcmp.ne.s32.totalorder %v2396, 0
      %vm2525 = vcmp.ne.s32.totalorder %v2397, 0
      %vm2526 = vcmp.ne.s32.totalorder %v2398, 0
      %vm2527 = vcmp.ne.s32.totalorder %v2399, 0
      %vm2528 = vcmp.ne.s32.totalorder %v2400, 0
      %vm2529 = vcmp.ne.s32.totalorder %v2401, 0
      %vm2530 = vcmp.ne.s32.totalorder %v2402, 0
      %vm2531 = vcmp.ne.s32.totalorder %v2403, 0
      %vm2532 = vcmp.ne.s32.totalorder %v2404, 0
      %vm2533 = vcmp.ne.s32.totalorder %v2405, 0
      %vm2534 = vcmp.ne.s32.totalorder %v2406, 0
      %vm2535 = vcmp.ne.s32.totalorder %v2407, 0
      %vm2536 = vcmp.ne.s32.totalorder %v2408, 0
      %vm2537 = vcmp.ne.s32.totalorder %v2409, 0
      %vm2538 = vcmp.ne.s32.totalorder %v2410, 0
      %vm2539 = vcmp.ne.s32.totalorder %v2411, 0
      %vm2540 = vcmp.ne.s32.totalorder %v2412, 0
      %vm2541 = vcmp.ne.s32.totalorder %v2413, 0
      %vm2542 = vcmp.ne.s32.totalorder %v2414, 0
      %vm2543 = vcmp.ne.s32.totalorder %v2415, 0
      %vm2544 = vcmp.ne.s32.totalorder %v2416, 0
      %vm2545 = vcmp.ne.s32.totalorder %v2417, 0
      %vm2546 = vcmp.ne.s32.totalorder %v2418, 0
      %vm2547 = vcmp.ne.s32.totalorder %v2419, 0
      %vm2548 = vcmp.ne.s32.totalorder %v2420, 0
      %vm2549 = vcmp.ne.s32.totalorder %v2421, 0
      %vm2550 = vcmp.ne.s32.totalorder %v2422, 0
      %vm2551 = vcmp.ne.s32.totalorder %v2423, 0
      %vm2552 = vcmp.ne.s32.totalorder %v2424, 0
      %vm2553 = vcmp.ne.s32.totalorder %v2425, 0
      %vm2554 = vcmp.ne.s32.totalorder %v2426, 0
      %vm2555 = vcmp.ne.s32.totalorder %v2427, 0
      %vm2556 = vcmp.ne.s32.totalorder %v2428, 0
      %vm2557 = vcmp.ne.s32.totalorder %v2429, 0
      %vm2558 = vcmp.ne.s32.totalorder %v2430, 0
      %vm2559 = vcmp.ne.s32.totalorder %v2431, 0
      %vm2560 = vcmp.ne.s32.totalorder %v2432, 0
      %vm2561 = vcmp.ne.s32.totalorder %v2433, 0
      %vm2562 = vcmp.ne.s32.totalorder %v2434, 0
      %vm2563 = vcmp.ne.s32.totalorder %v2435, 0
      %vm2564 = vcmp.ne.s32.totalorder %v2436, 0
      %vm2565 = vcmp.ne.s32.totalorder %v2437, 0
      %vm2566 = vcmp.ne.s32.totalorder %v2438, 0
      %vm2567 = vcmp.ne.s32.totalorder %v2439, 0
      %vm2568 = vcmp.ne.s32.totalorder %v2440, 0
      %vm2569 = vcmp.ne.s32.totalorder %v2441, 0
      %vm2570 = vcmp.ne.s32.totalorder %v2442, 0
      %vm2571 = vcmp.ne.s32.totalorder %v2443, 0
      %vm2572 = vcmp.ne.s32.totalorder %v2444, 0
      %vm2573 = vcmp.ne.s32.totalorder %v2445, 0
      %vm2574 = vcmp.ne.s32.totalorder %v2446, 0
      %vm2575 = vcmp.ne.s32.totalorder %v2447, 0
      %vm2576 = vcmp.ne.s32.totalorder %v2448, 0
      %vm2577 = vcmp.ne.s32.totalorder %v2449, 0
      %vm2578 = vcmp.ne.s32.totalorder %v2450, 0
      %vm2579 = vcmp.ne.s32.totalorder %v2451, 0
      %vm2580 = vcmp.ne.s32.totalorder %v2452, 0
      %vm2581 = vcmp.ne.s32.totalorder %v2453, 0
      %vm2582 = vcmp.ne.s32.totalorder %v2454, 0
      %vm2583 = vcmp.ne.s32.totalorder %v2455, 0
      %vm2584 = vcmp.ne.s32.totalorder %v2456, 0
      %vm2585 = vcmp.ne.s32.totalorder %v2457, 0
      %vm2586 = vcmp.ne.s32.totalorder %v2458, 0
      %vm2587 = vcmp.ne.s32.totalorder %v2459, 0
      %vm2588 = vcmp.ne.s32.totalorder %v2460, 0
      %vm2589 = vcmp.ne.s32.totalorder %v2461, 0
      %vm2590 = vcmp.ne.s32.totalorder %v2462, 0
      %vm2591 = vcmp.ne.s32.totalorder %v2463, 0
      %vm2592 = vcmp.ne.s32.totalorder %v2464, 0
      %vm2593 = vcmp.ne.s32.totalorder %v2465, 0
      %vm2594 = vcmp.ne.s32.totalorder %v2466, 0
      %vm2595 = vcmp.ne.s32.totalorder %v2467, 0
      %vm2596 = vcmp.ne.s32.totalorder %v2468, 0
      %vm2597 = vcmp.ne.s32.totalorder %v2469, 0
      %vm2598 = vcmp.ne.s32.totalorder %v2470, 0
      %vm2599 = vcmp.ne.s32.totalorder %v2471, 0
      %vm2600 = vcmp.ne.s32.totalorder %v2472, 0
      %vm2601 = vcmp.ne.s32.totalorder %v2473, 0
      %vm2602 = vcmp.ne.s32.totalorder %v2474, 0
      %vm2603 = vcmp.ne.s32.totalorder %v2475, 0
      %vm2604 = vcmp.ne.s32.totalorder %v2476, 0
      %vm2605 = vcmp.ne.s32.totalorder %v2477, 0
      %vm2606 = vcmp.ne.s32.totalorder %v2478, 0
      %vm2607 = vcmp.ne.s32.totalorder %v2479, 0
      %vm2608 = vcmp.ne.s32.totalorder %v2480, 0
      %vm2609 = vcmp.ne.s32.totalorder %v2481, 0
      %vm2610 = vcmp.ne.s32.totalorder %v2482, 0
      %vm2611 = vcmp.ne.s32.totalorder %v2483, 0
      %vm2612 = vcmp.ne.s32.totalorder %v2484, 0
      %vm2613 = vcmp.ne.s32.totalorder %v2485, 0
      %vm2614 = vcmp.ne.s32.totalorder %v2486, 0
      %vm2615 = vcmp.ne.s32.totalorder %v2487, 0
      %vm2616 = vcmp.ne.s32.totalorder %v2488, 0
      %vm2617 = vcmp.ne.s32.totalorder %v2489, 0
      %v2618 = vsel %vm2490, %v1787, 0.0
      %v2619 = vsel %vm2491, %v1789, 0.0
      %v2620 = vsel %vm2492, %v1791, 0.0
      %v2621 = vsel %vm2493, %v1793, 0.0
      %v2622 = vsel %vm2494, %v1795, 0.0
      %v2623 = vsel %vm2495, %v1797, 0.0
      %v2624 = vsel %vm2496, %v1799, 0.0
      %v2625 = vsel %vm2497, %v1801, 0.0
      %v2626 = vsel %vm2498, %v1803, 0.0
      %v2627 = vsel %vm2499, %v1805, 0.0
      %v2628 = vsel %vm2500, %v1807, 0.0
      %v2629 = vsel %vm2501, %v1809, 0.0
      %v2630 = vsel %vm2502, %v1811, 0.0
      %v2631 = vsel %vm2503, %v1813, 0.0
      %v2632 = vsel %vm2504, %v1815, 0.0
      %v2633 = vsel %vm2505, %v1817, 0.0
      %v2634 = vsel %vm2506, %v1819, 0.0
      %v2635 = vsel %vm2507, %v1821, 0.0
      %v2636 = vsel %vm2508, %v1823, 0.0
      %v2637 = vsel %vm2509, %v1825, 0.0
      %v2638 = vsel %vm2510, %v1827, 0.0
      %v2639 = vsel %vm2511, %v1829, 0.0
      %v2640 = vsel %vm2512, %v1831, 0.0
      %v2641 = vsel %vm2513, %v1833, 0.0
      %v2642 = vsel %vm2514, %v1835, 0.0
      %v2643 = vsel %vm2515, %v1837, 0.0
      %v2644 = vsel %vm2516, %v1839, 0.0
      %v2645 = vsel %vm2517, %v1841, 0.0
      %v2646 = vsel %vm2518, %v1843, 0.0
      %v2647 = vsel %vm2519, %v1845, 0.0
      %v2648 = vsel %vm2520, %v1847, 0.0
      %v2649 = vsel %vm2521, %v1849, 0.0
      %v2650 = vsel %vm2522, %v1851, 0.0
      %v2651 = vsel %vm2523, %v1853, 0.0
      %v2652 = vsel %vm2524, %v1855, 0.0
      %v2653 = vsel %vm2525, %v1857, 0.0
      %v2654 = vsel %vm2526, %v1859, 0.0
      %v2655 = vsel %vm2527, %v1861, 0.0
      %v2656 = vsel %vm2528, %v1863, 0.0
      %v2657 = vsel %vm2529, %v1865, 0.0
      %v2658 = vsel %vm2530, %v1867, 0.0
      %v2659 = vsel %vm2531, %v1869, 0.0
      %v2660 = vsel %vm2532, %v1871, 0.0
      %v2661 = vsel %vm2533, %v1873, 0.0
      %v2662 = vsel %vm2534, %v1875, 0.0
      %v2663 = vsel %vm2535, %v1877, 0.0
      %v2664 = vsel %vm2536, %v1879, 0.0
      %v2665 = vsel %vm2537, %v1881, 0.0
      %v2666 = vsel %vm2538, %v1883, 0.0
      %v2667 = vsel %vm2539, %v1885, 0.0
      %v2668 = vsel %vm2540, %v1887, 0.0
      %v2669 = vsel %vm2541, %v1889, 0.0
      %v2670 = vsel %vm2542, %v1891, 0.0
      %v2671 = vsel %vm2543, %v1893, 0.0
      %v2672 = vsel %vm2544, %v1895, 0.0
      %v2673 = vsel %vm2545, %v1897, 0.0
      %v2674 = vsel %vm2546, %v1899, 0.0
      %v2675 = vsel %vm2547, %v1901, 0.0
      %v2676 = vsel %vm2548, %v1903, 0.0
      %v2677 = vsel %vm2549, %v1905, 0.0
      %v2678 = vsel %vm2550, %v1907, 0.0
      %v2679 = vsel %vm2551, %v1909, 0.0
      %v2680 = vsel %vm2552, %v1911, 0.0
      %v2681 = vsel %vm2553, %v1913, 0.0
      %v2682 = vsel %vm2554, %v1915, 0.0
      %v2683 = vsel %vm2555, %v1917, 0.0
      %v2684 = vsel %vm2556, %v1919, 0.0
      %v2685 = vsel %vm2557, %v1921, 0.0
      %v2686 = vsel %vm2558, %v1923, 0.0
      %v2687 = vsel %vm2559, %v1925, 0.0
      %v2688 = vsel %vm2560, %v1927, 0.0
      %v2689 = vsel %vm2561, %v1929, 0.0
      %v2690 = vsel %vm2562, %v1931, 0.0
      %v2691 = vsel %vm2563, %v1933, 0.0
      %v2692 = vsel %vm2564, %v1935, 0.0
      %v2693 = vsel %vm2565, %v1937, 0.0
      %v2694 = vsel %vm2566, %v1939, 0.0
      %v2695 = vsel %vm2567, %v1941, 0.0
      %v2696 = vsel %vm2568, %v1943, 0.0
      %v2697 = vsel %vm2569, %v1945, 0.0
      %v2698 = vsel %vm2570, %v1947, 0.0
      %v2699 = vsel %vm2571, %v1949, 0.0
      %v2700 = vsel %vm2572, %v1951, 0.0
      %v2701 = vsel %vm2573, %v1953, 0.0
      %v2702 = vsel %vm2574, %v1955, 0.0
      %v2703 = vsel %vm2575, %v1957, 0.0
      %v2704 = vsel %vm2576, %v1959, 0.0
      %v2705 = vsel %vm2577, %v1961, 0.0
      %v2706 = vsel %vm2578, %v1963, 0.0
      %v2707 = vsel %vm2579, %v1965, 0.0
      %v2708 = vsel %vm2580, %v1967, 0.0
      %v2709 = vsel %vm2581, %v1969, 0.0
      %v2710 = vsel %vm2582, %v1971, 0.0
      %v2711 = vsel %vm2583, %v1973, 0.0
      %v2712 = vsel %vm2584, %v1975, 0.0
      %v2713 = vsel %vm2585, %v1977, 0.0
      %v2714 = vsel %vm2586, %v1979, 0.0
      %v2715 = vsel %vm2587, %v1981, 0.0
      %v2716 = vsel %vm2588, %v1983, 0.0
      %v2717 = vsel %vm2589, %v1985, 0.0
      %v2718 = vsel %vm2590, %v1987, 0.0
      %v2719 = vsel %vm2591, %v1989, 0.0
      %v2720 = vsel %vm2592, %v1991, 0.0
      %v2721 = vsel %vm2593, %v1993, 0.0
      %v2722 = vsel %vm2594, %v1995, 0.0
      %v2723 = vsel %vm2595, %v1997, 0.0
      %v2724 = vsel %vm2596, %v1999, 0.0
      %v2725 = vsel %vm2597, %v2001, 0.0
      %v2726 = vsel %vm2598, %v2003, 0.0
      %v2727 = vsel %vm2599, %v2005, 0.0
      %v2728 = vsel %vm2600, %v2007, 0.0
      %v2729 = vsel %vm2601, %v2009, 0.0
      %v2730 = vsel %vm2602, %v2011, 0.0
      %v2731 = vsel %vm2603, %v2013, 0.0
      %v2732 = vsel %vm2604, %v2015, 0.0
      %v2733 = vsel %vm2605, %v2017, 0.0
      %v2734 = vsel %vm2606, %v2019, 0.0
      %v2735 = vsel %vm2607, %v2021, 0.0
      %v2736 = vsel %vm2608, %v2023, 0.0
      %v2737 = vsel %vm2609, %v2025, 0.0
      %v2738 = vsel %vm2610, %v2027, 0.0
      %v2739 = vsel %vm2611, %v2029, 0.0
      %v2740 = vsel %vm2612, %v2031, 0.0
      %v2741 = vsel %vm2613, %v2033, 0.0
      %v2742 = vsel %vm2614, %v2035, 0.0
      %v2743 = vsel %vm2615, %v2037, 0.0
      %v2744 = vsel %vm2616, %v2039, 0.0
      %v2745 = vsel %vm2617, %v2041, 0.0
      %2746 = vst [vmem:[%s294] sm:$0xff] %v2618
      %2747 = vst [vmem:[%s294 + $0x8] sm:$0xff] %v2619
      %2748 = vst [vmem:[%s294 + $0x10] sm:$0xff] %v2620
      %2749 = vst [vmem:[%s294 + $0x18] sm:$0xff] %v2621
      %2750 = vst [vmem:[%s294 + $0x20] sm:$0xff] %v2622
      %2751 = vst [vmem:[%s294 + $0x28] sm:$0xff] %v2623
      %2752 = vst [vmem:[%s294 + $0x30] sm:$0xff] %v2624
      %2753 = vst [vmem:[%s294 + $0x38] sm:$0xff] %v2625
      %2754 = vst [vmem:[%s294 + $0x40] sm:$0xff] %v2626
      %2755 = vst [vmem:[%s294 + $0x48] sm:$0xff] %v2627
      %2756 = vst [vmem:[%s294 + $0x50] sm:$0xff] %v2628
      %2757 = vst [vmem:[%s294 + $0x58] sm:$0xff] %v2629
      %2758 = vst [vmem:[%s294 + $0x60] sm:$0xff] %v2630
      %2759 = vst [vmem:[%s294 + $0x68] sm:$0xff] %v2631
      %2760 = vst [vmem:[%s294 + $0x70] sm:$0xff] %v2632
      %2761 = vst [vmem:[%s294 + $0x78] sm:$0xff] %v2633
      %2762 = vst [vmem:[%s294 + $0x80] sm:$0xff] %v2634
      %2763 = vst [vmem:[%s294 + $0x88] sm:$0xff] %v2635
      %2764 = vst [vmem:[%s294 + $0x90] sm:$0xff] %v2636
      %2765 = vst [vmem:[%s294 + $0x98] sm:$0xff] %v2637
      %2766 = vst [vmem:[%s294 + $0xa0] sm:$0xff] %v2638
      %2767 = vst [vmem:[%s294 + $0xa8] sm:$0xff] %v2639
      %2768 = vst [vmem:[%s294 + $0xb0] sm:$0xff] %v2640
      %2769 = vst [vmem:[%s294 + $0xb8] sm:$0xff] %v2641
      %2770 = vst [vmem:[%s294 + $0xc0] sm:$0xff] %v2642
      %2771 = vst [vmem:[%s294 + $0xc8] sm:$0xff] %v2643
      %2772 = vst [vmem:[%s294 + $0xd0] sm:$0xff] %v2644
      %2773 = vst [vmem:[%s294 + $0xd8] sm:$0xff] %v2645
      %2774 = vst [vmem:[%s294 + $0xe0] sm:$0xff] %v2646
      %2775 = vst [vmem:[%s294 + $0xe8] sm:$0xff] %v2647
      %2776 = vst [vmem:[%s294 + $0xf0] sm:$0xff] %v2648
      %2777 = vst [vmem:[%s294 + $0xf8] sm:$0xff] %v2649
      %2778 = vst [vmem:[%s294 + $0x100] sm:$0xff] %v2650
      %2779 = vst [vmem:[%s294 + $0x108] sm:$0xff] %v2651
      %2780 = vst [vmem:[%s294 + $0x110] sm:$0xff] %v2652
      %2781 = vst [vmem:[%s294 + $0x118] sm:$0xff] %v2653
      %2782 = vst [vmem:[%s294 + $0x120] sm:$0xff] %v2654
      %2783 = vst [vmem:[%s294 + $0x128] sm:$0xff] %v2655
      %2784 = vst [vmem:[%s294 + $0x130] sm:$0xff] %v2656
      %2785 = vst [vmem:[%s294 + $0x138] sm:$0xff] %v2657
      %2786 = vst [vmem:[%s294 + $0x140] sm:$0xff] %v2658
      %2787 = vst [vmem:[%s294 + $0x148] sm:$0xff] %v2659
      %2788 = vst [vmem:[%s294 + $0x150] sm:$0xff] %v2660
      %2789 = vst [vmem:[%s294 + $0x158] sm:$0xff] %v2661
      %2790 = vst [vmem:[%s294 + $0x160] sm:$0xff] %v2662
      %2791 = vst [vmem:[%s294 + $0x168] sm:$0xff] %v2663
      %2792 = vst [vmem:[%s294 + $0x170] sm:$0xff] %v2664
      %2793 = vst [vmem:[%s294 + $0x178] sm:$0xff] %v2665
      %2794 = vst [vmem:[%s294 + $0x180] sm:$0xff] %v2666
      %2795 = vst [vmem:[%s294 + $0x188] sm:$0xff] %v2667
      %2796 = vst [vmem:[%s294 + $0x190] sm:$0xff] %v2668
      %2797 = vst [vmem:[%s294 + $0x198] sm:$0xff] %v2669
      %2798 = vst [vmem:[%s294 + $0x1a0] sm:$0xff] %v2670
      %2799 = vst [vmem:[%s294 + $0x1a8] sm:$0xff] %v2671
      %2800 = vst [vmem:[%s294 + $0x1b0] sm:$0xff] %v2672
      %2801 = vst [vmem:[%s294 + $0x1b8] sm:$0xff] %v2673
      %2802 = vst [vmem:[%s294 + $0x1c0] sm:$0xff] %v2674
      %2803 = vst [vmem:[%s294 + $0x1c8] sm:$0xff] %v2675
      %2804 = vst [vmem:[%s294 + $0x1d0] sm:$0xff] %v2676
      %2805 = vst [vmem:[%s294 + $0x1d8] sm:$0xff] %v2677
      %2806 = vst [vmem:[%s294 + $0x1e0] sm:$0xff] %v2678
      %2807 = vst [vmem:[%s294 + $0x1e8] sm:$0xff] %v2679
      %2808 = vst [vmem:[%s294 + $0x1f0] sm:$0xff] %v2680
      %2809 = vst [vmem:[%s294 + $0x1f8] sm:$0xff] %v2681
      %2810 = vst [vmem:[%s294 + $0x200] sm:$0xff] %v2682
      %2811 = vst [vmem:[%s294 + $0x208] sm:$0xff] %v2683
      %2812 = vst [vmem:[%s294 + $0x210] sm:$0xff] %v2684
      %2813 = vst [vmem:[%s294 + $0x218] sm:$0xff] %v2685
      %2814 = vst [vmem:[%s294 + $0x220] sm:$0xff] %v2686
      %2815 = vst [vmem:[%s294 + $0x228] sm:$0xff] %v2687
      %2816 = vst [vmem:[%s294 + $0x230] sm:$0xff] %v2688
      %2817 = vst [vmem:[%s294 + $0x238] sm:$0xff] %v2689
      %2818 = vst [vmem:[%s294 + $0x240] sm:$0xff] %v2690
      %2819 = vst [vmem:[%s294 + $0x248] sm:$0xff] %v2691
      %2820 = vst [vmem:[%s294 + $0x250] sm:$0xff] %v2692
      %2821 = vst [vmem:[%s294 + $0x258] sm:$0xff] %v2693
      %2822 = vst [vmem:[%s294 + $0x260] sm:$0xff] %v2694
      %2823 = vst [vmem:[%s294 + $0x268] sm:$0xff] %v2695
      %2824 = vst [vmem:[%s294 + $0x270] sm:$0xff] %v2696
      %2825 = vst [vmem:[%s294 + $0x278] sm:$0xff] %v2697
      %2826 = vst [vmem:[%s294 + $0x280] sm:$0xff] %v2698
      %2827 = vst [vmem:[%s294 + $0x288] sm:$0xff] %v2699
      %2828 = vst [vmem:[%s294 + $0x290] sm:$0xff] %v2700
      %2829 = vst [vmem:[%s294 + $0x298] sm:$0xff] %v2701
      %2830 = vst [vmem:[%s294 + $0x2a0] sm:$0xff] %v2702
      %2831 = vst [vmem:[%s294 + $0x2a8] sm:$0xff] %v2703
      %2832 = vst [vmem:[%s294 + $0x2b0] sm:$0xff] %v2704
      %2833 = vst [vmem:[%s294 + $0x2b8] sm:$0xff] %v2705
      %2834 = vst [vmem:[%s294 + $0x2c0] sm:$0xff] %v2706
      %2835 = vst [vmem:[%s294 + $0x2c8] sm:$0xff] %v2707
      %2836 = vst [vmem:[%s294 + $0x2d0] sm:$0xff] %v2708
      %2837 = vst [vmem:[%s294 + $0x2d8] sm:$0xff] %v2709
      %2838 = vst [vmem:[%s294 + $0x2e0] sm:$0xff] %v2710
      %2839 = vst [vmem:[%s294 + $0x2e8] sm:$0xff] %v2711
      %2840 = vst [vmem:[%s294 + $0x2f0] sm:$0xff] %v2712
      %2841 = vst [vmem:[%s294 + $0x2f8] sm:$0xff] %v2713
      %2842 = vst [vmem:[%s294 + $0x300] sm:$0xff] %v2714
      %2843 = vst [vmem:[%s294 + $0x308] sm:$0xff] %v2715
      %2844 = vst [vmem:[%s294 + $0x310] sm:$0xff] %v2716
      %2845 = vst [vmem:[%s294 + $0x318] sm:$0xff] %v2717
      %2846 = vst [vmem:[%s294 + $0x320] sm:$0xff] %v2718
      %2847 = vst [vmem:[%s294 + $0x328] sm:$0xff] %v2719
      %2848 = vst [vmem:[%s294 + $0x330] sm:$0xff] %v2720
      %2849 = vst [vmem:[%s294 + $0x338] sm:$0xff] %v2721
      %2850 = vst [vmem:[%s294 + $0x340] sm:$0xff] %v2722
      %2851 = vst [vmem:[%s294 + $0x348] sm:$0xff] %v2723
      %2852 = vst [vmem:[%s294 + $0x350] sm:$0xff] %v2724
      %2853 = vst [vmem:[%s294 + $0x358] sm:$0xff] %v2725
      %2854 = vst [vmem:[%s294 + $0x360] sm:$0xff] %v2726
      %2855 = vst [vmem:[%s294 + $0x368] sm:$0xff] %v2727
      %2856 = vst [vmem:[%s294 + $0x370] sm:$0xff] %v2728
      %2857 = vst [vmem:[%s294 + $0x378] sm:$0xff] %v2729
      %2858 = vst [vmem:[%s294 + $0x380] sm:$0xff] %v2730
      %2859 = vst [vmem:[%s294 + $0x388] sm:$0xff] %v2731
      %2860 = vst [vmem:[%s294 + $0x390] sm:$0xff] %v2732
      %2861 = vst [vmem:[%s294 + $0x398] sm:$0xff] %v2733
      %2862 = vst [vmem:[%s294 + $0x3a0] sm:$0xff] %v2734
      %2863 = vst [vmem:[%s294 + $0x3a8] sm:$0xff] %v2735
      %2864 = vst [vmem:[%s294 + $0x3b0] sm:$0xff] %v2736
      %2865 = vst [vmem:[%s294 + $0x3b8] sm:$0xff] %v2737
      %2866 = vst [vmem:[%s294 + $0x3c0] sm:$0xff] %v2738
      %2867 = vst [vmem:[%s294 + $0x3c8] sm:$0xff] %v2739
      %2868 = vst [vmem:[%s294 + $0x3d0] sm:$0xff] %v2740
      %2869 = vst [vmem:[%s294 + $0x3d8] sm:$0xff] %v2741
      %2870 = vst [vmem:[%s294 + $0x3e0] sm:$0xff] %v2742
      %2871 = vst [vmem:[%s294 + $0x3e8] sm:$0xff] %v2743
      %2872 = vst [vmem:[%s294 + $0x3f0] sm:$0xff] %v2744
      %2873 = vst [vmem:[%s294 + $0x3f8] sm:$0xff] %v2745
      %v2874 = vld [vmem:[%s301] sm:$0xff]
      %v2875 = vld [vmem:[%s301 + $0x8] sm:$0xff]
      %v2876 = vld [vmem:[%s301 + $0x10] sm:$0xff]
      %v2877 = vld [vmem:[%s301 + $0x18] sm:$0xff]
      %v2878 = vld [vmem:[%s301 + $0x20] sm:$0xff]
      %v2879 = vld [vmem:[%s301 + $0x28] sm:$0xff]
      %v2880 = vld [vmem:[%s301 + $0x30] sm:$0xff]
      %v2881 = vld [vmem:[%s301 + $0x38] sm:$0xff]
      %v2882 = vld [vmem:[%s301 + $0x40] sm:$0xff]
      %v2883 = vld [vmem:[%s301 + $0x48] sm:$0xff]
      %v2884 = vld [vmem:[%s301 + $0x50] sm:$0xff]
      %v2885 = vld [vmem:[%s301 + $0x58] sm:$0xff]
      %v2886 = vld [vmem:[%s301 + $0x60] sm:$0xff]
      %v2887 = vld [vmem:[%s301 + $0x68] sm:$0xff]
      %v2888 = vld [vmem:[%s301 + $0x70] sm:$0xff]
      %v2889 = vld [vmem:[%s301 + $0x78] sm:$0xff]
      %v2890 = vld [vmem:[%s301 + $0x80] sm:$0xff]
      %v2891 = vld [vmem:[%s301 + $0x88] sm:$0xff]
      %v2892 = vld [vmem:[%s301 + $0x90] sm:$0xff]
      %v2893 = vld [vmem:[%s301 + $0x98] sm:$0xff]
      %v2894 = vld [vmem:[%s301 + $0xa0] sm:$0xff]
      %v2895 = vld [vmem:[%s301 + $0xa8] sm:$0xff]
      %v2896 = vld [vmem:[%s301 + $0xb0] sm:$0xff]
      %v2897 = vld [vmem:[%s301 + $0xb8] sm:$0xff]
      %v2898 = vld [vmem:[%s301 + $0xc0] sm:$0xff]
      %v2899 = vld [vmem:[%s301 + $0xc8] sm:$0xff]
      %v2900 = vld [vmem:[%s301 + $0xd0] sm:$0xff]
      %v2901 = vld [vmem:[%s301 + $0xd8] sm:$0xff]
      %v2902 = vld [vmem:[%s301 + $0xe0] sm:$0xff]
      %v2903 = vld [vmem:[%s301 + $0xe8] sm:$0xff]
      %v2904 = vld [vmem:[%s301 + $0xf0] sm:$0xff]
      %v2905 = vld [vmem:[%s301 + $0xf8] sm:$0xff]
      %v2906 = vadd.f32 %v2618, %v2619
      %v2907 = vadd.f32 %v2906, %v2620
      %v2908 = vadd.f32 %v2907, %v2621
      %2909 = vadd.xlane.f32.xlu0 %v2908
      %v2910 = vpop.xlane.xlu0 %2909
      %v2911 = vadd.f32 %v2622, %v2623
      %v2912 = vadd.f32 %v2911, %v2624
      %v2913 = vadd.f32 %v2912, %v2625
      %2914 = vadd.xlane.f32.xlu0 %v2913
      %v2915 = vpop.xlane.xlu0 %2914
      %v2916 = vadd.f32 %v2626, %v2627
      %v2917 = vadd.f32 %v2916, %v2628
      %v2918 = vadd.f32 %v2917, %v2629
      %2919 = vadd.xlane.f32.xlu0 %v2918
      %v2920 = vpop.xlane.xlu0 %2919
      %v2921 = vadd.f32 %v2630, %v2631
      %v2922 = vadd.f32 %v2921, %v2632
      %v2923 = vadd.f32 %v2922, %v2633
      %2924 = vadd.xlane.f32.xlu0 %v2923
      %v2925 = vpop.xlane.xlu0 %2924
      %v2926 = vadd.f32 %v2634, %v2635
      %v2927 = vadd.f32 %v2926, %v2636
      %v2928 = vadd.f32 %v2927, %v2637
      %2929 = vadd.xlane.f32.xlu0 %v2928
      %v2930 = vpop.xlane.xlu0 %2929
      %v2931 = vadd.f32 %v2638, %v2639
      %v2932 = vadd.f32 %v2931, %v2640
      %v2933 = vadd.f32 %v2932, %v2641
      %2934 = vadd.xlane.f32.xlu0 %v2933
      %v2935 = vpop.xlane.xlu0 %2934
      %v2936 = vadd.f32 %v2642, %v2643
      %v2937 = vadd.f32 %v2936, %v2644
      %v2938 = vadd.f32 %v2937, %v2645
      %2939 = vadd.xlane.f32.xlu0 %v2938
      %v2940 = vpop.xlane.xlu0 %2939
      %v2941 = vadd.f32 %v2646, %v2647
      %v2942 = vadd.f32 %v2941, %v2648
      %v2943 = vadd.f32 %v2942, %v2649
      %2944 = vadd.xlane.f32.xlu0 %v2943
      %v2945 = vpop.xlane.xlu0 %2944
      %v2946 = vadd.f32 %v2650, %v2651
      %v2947 = vadd.f32 %v2946, %v2652
      %v2948 = vadd.f32 %v2947, %v2653
      %2949 = vadd.xlane.f32.xlu0 %v2948
      %v2950 = vpop.xlane.xlu0 %2949
      %v2951 = vadd.f32 %v2654, %v2655
      %v2952 = vadd.f32 %v2951, %v2656
      %v2953 = vadd.f32 %v2952, %v2657
      %2954 = vadd.xlane.f32.xlu0 %v2953
      %v2955 = vpop.xlane.xlu0 %2954
      %v2956 = vadd.f32 %v2658, %v2659
      %v2957 = vadd.f32 %v2956, %v2660
      %v2958 = vadd.f32 %v2957, %v2661
      %2959 = vadd.xlane.f32.xlu0 %v2958
      %v2960 = vpop.xlane.xlu0 %2959
      %v2961 = vadd.f32 %v2662, %v2663
      %v2962 = vadd.f32 %v2961, %v2664
      %v2963 = vadd.f32 %v2962, %v2665
      %2964 = vadd.xlane.f32.xlu0 %v2963
      %v2965 = vpop.xlane.xlu0 %2964
      %v2966 = vadd.f32 %v2666, %v2667
      %v2967 = vadd.f32 %v2966, %v2668
      %v2968 = vadd.f32 %v2967, %v2669
      %2969 = vadd.xlane.f32.xlu0 %v2968
      %v2970 = vpop.xlane.xlu0 %2969
      %v2971 = vadd.f32 %v2670, %v2671
      %v2972 = vadd.f32 %v2971, %v2672
      %v2973 = vadd.f32 %v2972, %v2673
      %2974 = vadd.xlane.f32.xlu0 %v2973
      %v2975 = vpop.xlane.xlu0 %2974
      %v2976 = vadd.f32 %v2674, %v2675
      %v2977 = vadd.f32 %v2976, %v2676
      %v2978 = vadd.f32 %v2977, %v2677
      %2979 = vadd.xlane.f32.xlu0 %v2978
      %v2980 = vpop.xlane.xlu0 %2979
      %v2981 = vadd.f32 %v2678, %v2679
      %v2982 = vadd.f32 %v2981, %v2680
      %v2983 = vadd.f32 %v2982, %v2681
      %2984 = vadd.xlane.f32.xlu0 %v2983
      %v2985 = vpop.xlane.xlu0 %2984
      %v2986 = vadd.f32 %v2682, %v2683
      %v2987 = vadd.f32 %v2986, %v2684
      %v2988 = vadd.f32 %v2987, %v2685
      %2989 = vadd.xlane.f32.xlu0 %v2988
      %v2990 = vpop.xlane.xlu0 %2989
      %v2991 = vadd.f32 %v2686, %v2687
      %v2992 = vadd.f32 %v2991, %v2688
      %v2993 = vadd.f32 %v2992, %v2689
      %2994 = vadd.xlane.f32.xlu0 %v2993
      %v2995 = vpop.xlane.xlu0 %2994
      %v2996 = vadd.f32 %v2690, %v2691
      %v2997 = vadd.f32 %v2996, %v2692
      %v2998 = vadd.f32 %v2997, %v2693
      %2999 = vadd.xlane.f32.xlu0 %v2998
      %v3000 = vpop.xlane.xlu0 %2999
      %v3001 = vadd.f32 %v2694, %v2695
      %v3002 = vadd.f32 %v3001, %v2696
      %v3003 = vadd.f32 %v3002, %v2697
      %3004 = vadd.xlane.f32.xlu0 %v3003
      %v3005 = vpop.xlane.xlu0 %3004
      %v3006 = vadd.f32 %v2698, %v2699
      %v3007 = vadd.f32 %v3006, %v2700
      %v3008 = vadd.f32 %v3007, %v2701
      %3009 = vadd.xlane.f32.xlu0 %v3008
      %v3010 = vpop.xlane.xlu0 %3009
      %v3011 = vadd.f32 %v2702, %v2703
      %v3012 = vadd.f32 %v3011, %v2704
      %v3013 = vadd.f32 %v3012, %v2705
      %3014 = vadd.xlane.f32.xlu0 %v3013
      %v3015 = vpop.xlane.xlu0 %3014
      %v3016 = vadd.f32 %v2706, %v2707
      %v3017 = vadd.f32 %v3016, %v2708
      %v3018 = vadd.f32 %v3017, %v2709
      %3019 = vadd.xlane.f32.xlu0 %v3018
      %v3020 = vpop.xlane.xlu0 %3019
      %v3021 = vadd.f32 %v2710, %v2711
      %v3022 = vadd.f32 %v3021, %v2712
      %v3023 = vadd.f32 %v3022, %v2713
      %3024 = vadd.xlane.f32.xlu0 %v3023
      %v3025 = vpop.xlane.xlu0 %3024
      %v3026 = vadd.f32 %v2714, %v2715
      %v3027 = vadd.f32 %v3026, %v2716
      %v3028 = vadd.f32 %v3027, %v2717
      %3029 = vadd.xlane.f32.xlu0 %v3028
      %v3030 = vpop.xlane.xlu0 %3029
      %v3031 = vadd.f32 %v2718, %v2719
      %v3032 = vadd.f32 %v3031, %v2720
      %v3033 = vadd.f32 %v3032, %v2721
      %3034 = vadd.xlane.f32.xlu0 %v3033
      %v3035 = vpop.xlane.xlu0 %3034
      %v3036 = vadd.f32 %v2722, %v2723
      %v3037 = vadd.f32 %v3036, %v2724
      %v3038 = vadd.f32 %v3037, %v2725
      %3039 = vadd.xlane.f32.xlu0 %v3038
      %v3040 = vpop.xlane.xlu0 %3039
      %v3041 = vadd.f32 %v2726, %v2727
      %v3042 = vadd.f32 %v3041, %v2728
      %v3043 = vadd.f32 %v3042, %v2729
      %3044 = vadd.xlane.f32.xlu0 %v3043
      %v3045 = vpop.xlane.xlu0 %3044
      %v3046 = vadd.f32 %v2730, %v2731
      %v3047 = vadd.f32 %v3046, %v2732
      %v3048 = vadd.f32 %v3047, %v2733
      %3049 = vadd.xlane.f32.xlu0 %v3048
      %v3050 = vpop.xlane.xlu0 %3049
      %v3051 = vadd.f32 %v2734, %v2735
      %v3052 = vadd.f32 %v3051, %v2736
      %v3053 = vadd.f32 %v3052, %v2737
      %3054 = vadd.xlane.f32.xlu0 %v3053
      %v3055 = vpop.xlane.xlu0 %3054
      %v3056 = vadd.f32 %v2738, %v2739
      %v3057 = vadd.f32 %v3056, %v2740
      %v3058 = vadd.f32 %v3057, %v2741
      %3059 = vadd.xlane.f32.xlu0 %v3058
      %v3060 = vpop.xlane.xlu0 %3059
      %v3061 = vadd.f32 %v2742, %v2743
      %v3062 = vadd.f32 %v3061, %v2744
      %v3063 = vadd.f32 %v3062, %v2745
      %3064 = vadd.xlane.f32.xlu0 %v3063
      %v3065 = vpop.xlane.xlu0 %3064
      %v3066 = vadd.f32 %v2874, %v2910
      %v3067 = vadd.f32 %v2875, %v2915
      %v3068 = vadd.f32 %v2876, %v2920
      %v3069 = vadd.f32 %v2877, %v2925
      %v3070 = vadd.f32 %v2878, %v2930
      %v3071 = vadd.f32 %v2879, %v2935
      %v3072 = vadd.f32 %v2880, %v2940
      %v3073 = vadd.f32 %v2881, %v2945
      %v3074 = vadd.f32 %v2882, %v2950
      %v3075 = vadd.f32 %v2883, %v2955
      %v3076 = vadd.f32 %v2884, %v2960
      %v3077 = vadd.f32 %v2885, %v2965
      %v3078 = vadd.f32 %v2886, %v2970
      %v3079 = vadd.f32 %v2887, %v2975
      %v3080 = vadd.f32 %v2888, %v2980
      %v3081 = vadd.f32 %v2889, %v2985
      %v3082 = vadd.f32 %v2890, %v2990
      %v3083 = vadd.f32 %v2891, %v2995
      %v3084 = vadd.f32 %v2892, %v3000
      %v3085 = vadd.f32 %v2893, %v3005
      %v3086 = vadd.f32 %v2894, %v3010
      %v3087 = vadd.f32 %v2895, %v3015
      %v3088 = vadd.f32 %v2896, %v3020
      %v3089 = vadd.f32 %v2897, %v3025
      %v3090 = vadd.f32 %v2898, %v3030
      %v3091 = vadd.f32 %v2899, %v3035
      %v3092 = vadd.f32 %v2900, %v3040
      %v3093 = vadd.f32 %v2901, %v3045
      %v3094 = vadd.f32 %v2902, %v3050
      %v3095 = vadd.f32 %v2903, %v3055
      %v3096 = vadd.f32 %v2904, %v3060
      %v3097 = vadd.f32 %v2905, %v3065
      %vm3098 = vcmask 7168
      %3099 = vst.msk [vmem:[%s301] sm:$0xff] %vm3098, %v3066
      %3100 = vst.msk [vmem:[%s301 + $0x8] sm:$0xff] %vm3098, %v3067
      %3101 = vst.msk [vmem:[%s301 + $0x10] sm:$0xff] %vm3098, %v3068
      %3102 = vst.msk [vmem:[%s301 + $0x18] sm:$0xff] %vm3098, %v3069
      %3103 = vst.msk [vmem:[%s301 + $0x20] sm:$0xff] %vm3098, %v3070
      %3104 = vst.msk [vmem:[%s301 + $0x28] sm:$0xff] %vm3098, %v3071
      %3105 = vst.msk [vmem:[%s301 + $0x30] sm:$0xff] %vm3098, %v3072
      %3106 = vst.msk [vmem:[%s301 + $0x38] sm:$0xff] %vm3098, %v3073
      %3107 = vst.msk [vmem:[%s301 + $0x40] sm:$0xff] %vm3098, %v3074
      %3108 = vst.msk [vmem:[%s301 + $0x48] sm:$0xff] %vm3098, %v3075
      %3109 = vst.msk [vmem:[%s301 + $0x50] sm:$0xff] %vm3098, %v3076
      %3110 = vst.msk [vmem:[%s301 + $0x58] sm:$0xff] %vm3098, %v3077
      %3111 = vst.msk [vmem:[%s301 + $0x60] sm:$0xff] %vm3098, %v3078
      %3112 = vst.msk [vmem:[%s301 + $0x68] sm:$0xff] %vm3098, %v3079
      %3113 = vst.msk [vmem:[%s301 + $0x70] sm:$0xff] %vm3098, %v3080
      %3114 = vst.msk [vmem:[%s301 + $0x78] sm:$0xff] %vm3098, %v3081
      %3115 = vst.msk [vmem:[%s301 + $0x80] sm:$0xff] %vm3098, %v3082
      %3116 = vst.msk [vmem:[%s301 + $0x88] sm:$0xff] %vm3098, %v3083
      %3117 = vst.msk [vmem:[%s301 + $0x90] sm:$0xff] %vm3098, %v3084
      %3118 = vst.msk [vmem:[%s301 + $0x98] sm:$0xff] %vm3098, %v3085
      %3119 = vst.msk [vmem:[%s301 + $0xa0] sm:$0xff] %vm3098, %v3086
      %3120 = vst.msk [vmem:[%s301 + $0xa8] sm:$0xff] %vm3098, %v3087
      %3121 = vst.msk [vmem:[%s301 + $0xb0] sm:$0xff] %vm3098, %v3088
      %3122 = vst.msk [vmem:[%s301 + $0xb8] sm:$0xff] %vm3098, %v3089
      %3123 = vst.msk [vmem:[%s301 + $0xc0] sm:$0xff] %vm3098, %v3090
      %3124 = vst.msk [vmem:[%s301 + $0xc8] sm:$0xff] %vm3098, %v3091
      %3125 = vst.msk [vmem:[%s301 + $0xd0] sm:$0xff] %vm3098, %v3092
      %3126 = vst.msk [vmem:[%s301 + $0xd8] sm:$0xff] %vm3098, %v3093
      %3127 = vst.msk [vmem:[%s301 + $0xe0] sm:$0xff] %vm3098, %v3094
      %3128 = vst.msk [vmem:[%s301 + $0xe8] sm:$0xff] %vm3098, %v3095
      %3129 = vst.msk [vmem:[%s301 + $0xf0] sm:$0xff] %vm3098, %v3096
      %3130 = vst.msk [vmem:[%s301 + $0xf8] sm:$0xff] %vm3098, %v3097
      %s3131 = smul.u32 32, %s20
      %s3132 = smul.u32 4, %s21
      %p3133 = scmp.lt.s32.totalorder %s3131, 63
      %s3134 = scalar_select %p3133, %s3131, 63
      %p3135 = scmp.lt.s32.totalorder %s3132, 3
      %s3136 = scalar_select %p3135, %s3132, 3
      %s3137 = smul.addr %s3134, 4
      %s3138 = sadd.s32 %s3136, %s3137
      %s3139 = smul.addr %s3138, 8
      %s3140 = scalar_lea.vmem %s3, %s3139
      %s3141 = smul.u32 32, %s20
      %p3142 = scmp.lt.s32.totalorder %s3141, 63
      %s3143 = scalar_select %p3142, %s3141, 63
      %s3144 = smul.addr %s3143, 8
      %s3145 = scalar_lea.vmem %s4, %s3144
      // Predicated region
      $region37: #{_distance_dense.1} parent=31 // pred_check
        %p3146 = pneg %p128
      $region38: #{_distance_dense.1} parent=31 // pred_check_branch
        %3148 = sbr.rel (%p3146) target = $region40
      $region39: #{_distance_dense.1} parent=31 // pred_region
        %s3149 = smul.u32 32, %s20
        %s3150 = smul.u32 4, %s21
      $region40: #{_distance_dense.1} parent=31 // pred_fallthru
        _
      // Predicated region
      $region41: #{_distance_dense.1} parent=31 // pred_check
        %p3151 = pneg %p154
      $region42: #{_distance_dense.1} parent=31 // pred_check_branch
        %3153 = sbr.rel (%p3151) target = $region44
      $region43: #{_distance_dense.1} parent=31 // pred_region
        %s3154 = smul.u32 32, %s20
      $region44: #{_distance_dense.1} parent=31 // pred_fallthru
        _
    $region32: #{_distance_dense.1} parent=5 // pred_fallthru
      _
    %p3155 = scmp.le.s32.totalorder 2, %s11
    // Predicated region
    $region45: #{_distance_dense.1} parent=5 // pred_check
      %p3156 = pneg %p3155
    $region46: #{_distance_dense.1} parent=5 // pred_check_branch
      %3158 = sbr.rel (%p3156) target = $region48
    $region47: #{_distance_dense.1} parent=5 // pred_region
      %s3159 = ssub.s32 %s11, 2
      // Predicated region
      $region49: #{_distance_dense.1} parent=47 // pred_check
        %p3160 = pneg %p134
      $region50: #{_distance_dense.1} parent=47 // pred_check_branch
        %3162 = sbr.rel (%p3160) target = $region52
      $region51: #{_distance_dense.1} parent=47 // pred_region
        %s3163 = smul.u32 32, %s22
        %s3164 = smul.u32 4, %s23
        %p3165 = scmp.lt.s32.totalorder %s3163, 63
        %s3166 = scalar_select %p3165, %s3163, 63
        %p3167 = scmp.lt.s32.totalorder %s3164, 3
        %s3168 = scalar_select %p3167, %s3164, 3
        %s3169 = smul.addr %s3166, 4
        %s3170 = sadd.s32 %s3168, %s3169
        %s3171 = smul.addr %s3170, 8
        %s3172 = scalar_lea.vmem %s3, %s3171
      $region52: #{_distance_dense.1} parent=47 // pred_fallthru
        _
      // Predicated region
      $region53: #{_distance_dense.1} parent=47 // pred_check
        %p3173 = pneg %p160
      $region54: #{_distance_dense.1} parent=47 // pred_check_branch
        %3175 = sbr.rel (%p3173) target = $region56
      $region55: #{_distance_dense.1} parent=47 // pred_region
        %s3176 = smul.u32 32, %s22
        %p3177 = scmp.lt.s32.totalorder %s3176, 63
        %s3178 = scalar_select %p3177, %s3176, 63
        %s3179 = smul.addr %s3178, 8
        %s3180 = scalar_lea.vmem %s4, %s3179
      $region56: #{_distance_dense.1} parent=47 // pred_fallthru
        _
    $region48: #{_distance_dense.1} parent=5 // pred_fallthru
      _
  $region6: #{_distance_dense.1} parent=0 // loop_footer
    %s15 = sadd.s32 1, %s11
  $region7: #{_distance_dense.1} parent=0 // loop_footer_branch
    %10 = sbr.rel target = $region3
  $region8: #{_distance_dense.1} parent=0 // loop_exit
    _

</llo_original>
